<compile_context>
chip_gen: v7x
topology: tpu7x:2x2x1
jax: 0.10.0
libtpu: 0.0.40
codegen_flags: <defaults>
</compile_context>

<pallas_src>
import functools

import jax
import jax.numpy as jnp
from jax.experimental import pallas as pl
from jax.experimental.pallas import tpu as pltpu


# ----------------------------------------------------------------------------
# Shared in-kernel math: gcn_norm (dense, with self-loops) + 2 GCN layers.
#   out = adj_norm^T @ (relu(adj_norm^T @ (X @ W1) + b1) @ W2) + b2
# ----------------------------------------------------------------------------

def _gcn_two_layers(A, x, w1, b1, w2, b2):
    n = A.shape[0]
    rows = jax.lax.broadcasted_iota(jnp.int32, (n, n), 0)
    cols = jax.lax.broadcasted_iota(jnp.int32, (n, n), 1)
    eye = jnp.where(rows == cols, 1.0, 0.0)
    A_hat = jnp.maximum(A, eye)                              # add_remaining_self_loops
    deg = jnp.sum(A_hat, axis=0, keepdims=True)              # [1, n] in-degree
    dinv = jnp.where(deg > 0.0, 1.0 / jnp.sqrt(deg), 0.0)    # [1, n]
    # normT[t, s] = A_hat[s, t] * dinv[s] * dinv[t]  (= adj_norm^T), built with
    # one [n, n] transpose and two lane-broadcast multiplies (no column vector
    # of dinv needed).
    normT = (A_hat * dinv).T * dinv
    h = jnp.dot(x, w1, preferred_element_type=jnp.float32)
    h = jnp.dot(normT, h, preferred_element_type=jnp.float32) + b1
    h = jnp.maximum(h, 0.0)                                  # relu; dropout = identity (eval)
    h2 = jnp.dot(h, w2, preferred_element_type=jnp.float32)
    h2 = jnp.dot(normT, h2, preferred_element_type=jnp.float32) + b2
    return h2


# ----------------------------------------------------------------------------
# Kernel 1: fused per-subject pipeline, grid = (BZ,)
# ----------------------------------------------------------------------------

def _subject_kernel(t_ref, tT_ref, x_ref, dg_ref, wrd_ref, wsd_ref,
                    w1_ref, b1_ref, w2_ref, b2_ref, h_ref, adj_ref):
    t = t_ref[0]                       # [N, T]   subject time-courses
    tT = tT_ref[0]                     # [T, N]   (pre-transposed outside)
    x = x_ref[0]                       # [N, F0]  subject node features
    dg = dg_ref[0]                     # [N, N]   gumbel(g0-g1) + (b_cat0 - b_cat1)

    t_relu = jnp.maximum(t, 0.0)
    tT_relu = jnp.maximum(tT, 0.0)

    # logit difference of the 2-class edge classifier:
    #   score[i, j] = relu(t[i]) @ (Wr0-Wr1)  +  relu(t[j]) @ (Ws0-Ws1)  + (b0-b1) + (g0-g1)
    # (rel_rec / rel_send one-hot matmuls removed analytically).
    dv = jnp.sum(t_relu * wrd_ref[...], axis=1, keepdims=True)    # [N, 1] receiver term
    du = jnp.sum(tT_relu * wsd_ref[...], axis=0, keepdims=True)   # [1, N] sender term
    score = dv + du + dg                                          # [N, N]

    # gumbel_softmax(hard=True)[:, 0] over 2 classes == sign test (ties -> class 0)
    A = jnp.where(score >= 0.0, 1.0, 0.0)                         # optimal adjacency
    adj_ref[0] = A

    h_ref[0] = _gcn_two_layers(A, x, w1_ref[...], b1_ref[...],
                               w2_ref[...], b2_ref[...])


def subjects_fused(t_b, tT_b, x_b, dg, wrd_row, wsd_col, w1, b1, w2, b2):
    bz, N, T = t_b.shape
    F0 = x_b.shape[2]
    F1 = w1.shape[1]
    F2 = w2.shape[1]

    sub3 = lambda i: (i, 0, 0)     # per-subject blocks
    wmap = lambda i: (0, 0)        # weights stay VMEM-resident across subjects

    return pl.pallas_call(
        _subject_kernel,
        grid=(bz,),
        in_specs=[
            pl.BlockSpec((1, N, T), sub3),     # t
            pl.BlockSpec((1, T, N), sub3),     # t^T
            pl.BlockSpec((1, N, F0), sub3),    # x
            pl.BlockSpec((1, N, N), sub3),     # gumbel diff (+ bias diff)
            pl.BlockSpec((1, T), wmap),        # (Wr0 - Wr1)^T
            pl.BlockSpec((T, 1), wmap),        # (Ws0 - Ws1)
            pl.BlockSpec((F0, F1), wmap),      # w1
            pl.BlockSpec((1, F1), wmap),       # b1
            pl.BlockSpec((F1, F2), wmap),      # w2
            pl.BlockSpec((1, F2), wmap),       # b2
        ],
        out_specs=(pl.BlockSpec((1, N, F2), sub3),
                   pl.BlockSpec((1, N, N), sub3)),
        out_shape=(jax.ShapeDtypeStruct((bz, N, F2), jnp.float32),
                   jax.ShapeDtypeStruct((bz, N, N), jnp.float32)),
        compiler_params=pltpu.CompilerParams(
            dimension_semantics=("parallel",)),
    )(t_b, tT_b, x_b, dg, wrd_row, wsd_col, w1, b1, w2, b2)


# ----------------------------------------------------------------------------
# Single-step full-array pallas_call helper (shapes are tiny)
# ----------------------------------------------------------------------------

def _full_call(kernel, out_struct, *args):
    def spec(shape):
        nd = len(shape)
        return pl.BlockSpec(shape, lambda i, nd=nd: (0,) * nd)

    return pl.pallas_call(
        kernel,
        grid=(1,),
        in_specs=[spec(a.shape) for a in args],
        out_specs=spec(out_struct.shape),
        out_shape=out_struct,
    )(*args)


# ----------------------------------------------------------------------------
# Kernel 2: correlation-graph branch (whole batched graph, one launch)
# ----------------------------------------------------------------------------

def gcn_corr(A_g, x, w1, b1, w2, b2):
    def kernel(a_ref, x_ref, w1_ref, b1_ref, w2_ref, b2_ref, o_ref):
        o_ref[...] = _gcn_two_layers(a_ref[...], x_ref[...], w1_ref[...],
                                     b1_ref[...], w2_ref[...], b2_ref[...])

    out = jax.ShapeDtypeStruct((x.shape[0], w2.shape[1]), jnp.float32)
    return _full_call(kernel, out, A_g, x, w1, b1, w2, b2)


# ----------------------------------------------------------------------------
# Kernel 3: fused 3-layer MLP head (w3 -> leaky -> w4 -> leaky -> w5)
# ----------------------------------------------------------------------------

def mlp_head(xa, xb, w3a, w3b, b3, w4, b4, w5, b5, neg_slope):
    def kernel(xa_ref, xb_ref, w3a_ref, w3b_ref, b3_ref,
               w4_ref, b4_ref, w5_ref, b5_ref, o_ref):
        # emb @ w3 == x_op_flat @ w3_op + x_corr_flat @ w3_corr (w3 rows de-interleaved
        # outside), so the host-side concatenate is never materialized.
        h = (jnp.dot(xa_ref[...], w3a_ref[...], preferred_element_type=jnp.float32)
             + jnp.dot(xb_ref[...], w3b_ref[...], preferred_element_type=jnp.float32)
             + b3_ref[...])
        h = jnp.where(h >= 0.0, h, neg_slope * h)
        h = jnp.dot(h, w4_ref[...], preferred_element_type=jnp.float32) + b4_ref[...]
        h = jnp.where(h >= 0.0, h, neg_slope * h)
        o_ref[...] = (jnp.dot(h, w5_ref[...], preferred_element_type=jnp.float32)
                      + b5_ref[...])

    out = jax.ShapeDtypeStruct((xa.shape[0], w5.shape[1]), jnp.float32)
    return _full_call(kernel, out, xa, xb, w3a, w3b, b3, w4, b4, w5, b5)


# ----------------------------------------------------------------------------
# Forward pass (single jitted region; only tiny XLA glue between the 3 kernels)
# ----------------------------------------------------------------------------

@functools.partial(jax.jit, static_argnames=("num_nodes", "bz", "neg_slope"))
def bargrain_forward(params, x, t, edge_index, key, *, num_nodes, bz, neg_slope):
    N = num_nodes
    T = t.shape[1]
    F2 = params["w2"].shape[1]

    t_b = t.reshape(bz, N, T)
    tT_b = jnp.swapaxes(t_b, 1, 2)
    x_b = x.reshape(bz, N, x.shape[1])

    # gumbel noise (class-0 minus class-1) + bias difference, per subject
    g = jax.random.gumbel(key, (bz, N, N, 2), jnp.float32)
    db = params["b_cat"][0] - params["b_cat"][1]
    dg = g[..., 0] - g[..., 1] + db

    # fc_cat weight prep: W_cat = [Ws; Wr] (cat order [senders, receivers])
    ws = params["w_cat"][:T]
    wr = params["w_cat"][T:]
    wrd_row = (wr[:, 0] - wr[:, 1]).reshape(1, T)
    wsd_col = (ws[:, 0] - ws[:, 1]).reshape(T, 1)

    b1r = params["b1"].reshape(1, -1)
    b2r = params["b2"].reshape(1, -1)

    # --- fused per-subject branch (1 launch, grid over subjects) ---
    x_op, adj_all = subjects_fused(t_b, tT_b, x_b, dg, wrd_row, wsd_col,
                                   params["w1"], b1r, params["w2"], b2r)

    # --- correlation-graph branch over the full batched graph (1 launch) ---
    M_total = x.shape[0]
    A_g = jnp.zeros((M_total, M_total), jnp.float32)
    A_g = A_g.at[edge_index[0], edge_index[1]].set(1.0)     # scatter kept in XLA
    x_corr = gcn_corr(A_g, x, params["w1"], b1r, params["w2"], b2r)

    # --- fused MLP head (1 launch) ---
    w3 = params["w3"]
    H3 = w3.shape[1]
    w3r = w3.reshape(N, 2 * F2, H3)
    w3_op = w3r[:, :F2, :].reshape(N * F2, H3)
    w3_corr = w3r[:, F2:, :].reshape(N * F2, H3)
    xa = x_op.reshape(bz, N * F2)
    xb = x_corr.reshape(bz, N * F2)
    out = mlp_head(xa, xb, w3_op, w3_corr, params["b3"].reshape(1, -1),
                   params["w4"], params["b4"].reshape(1, -1),
                   params["w5"], params["b5"].reshape(1, -1), neg_slope)

    # TODO(synk): torch returns a variable-length optimal_edge_index (torch.where);
    # here we return the equivalent dense 0/1 optimal adjacency of the last subject.
    return out, edge_index, adj_all[-1]


# ----------------------------------------------------------------------------
# main
# ----------------------------------------------------------------------------

if __name__ == "__main__":
    # small deterministic setup
    N = 8          # num_nodes
    T = 8          # tc_length
    BZ = 2         # batch of subjects
    F1, F2 = 16, 8
    NEG_SLOPE = 0.2
    M_TOTAL = BZ * N

    key = jax.random.PRNGKey(0)
    k_x, k_t, k1, k2, kc, k3, k4, k5, k_g = jax.random.split(key, 9)

    # inputs: x [bz*N, N] node features, t [bz*N, T] time-course features
    x = jax.random.normal(k_x, (M_TOTAL, N), jnp.float32)
    t = jax.random.normal(k_t, (M_TOTAL, T), jnp.float32)

    # deterministic synthetic global edge_index (bidirectional ring over all nodes)
    src = jnp.concatenate([jnp.arange(M_TOTAL), (jnp.arange(M_TOTAL) + 1) % M_TOTAL])
    dst = jnp.concatenate([(jnp.arange(M_TOTAL) + 1) % M_TOTAL, jnp.arange(M_TOTAL)])
    edge_index = jnp.stack([src, dst])

    params = {
        # GCNConv(N, F1), GCNConv(F1, F2)
        "w1": 0.1 * jax.random.normal(k1, (N, F1), jnp.float32),
        "b1": jnp.zeros((F1,), jnp.float32),
        "w2": 0.1 * jax.random.normal(k2, (F1, F2), jnp.float32),
        "b2": jnp.zeros((F2,), jnp.float32),
        # fc_cat: Linear(2*T, 2)
        "w_cat": 0.1 * jax.random.normal(kc, (2 * T, 2), jnp.float32),
        "b_cat": jnp.zeros((2,), jnp.float32),
        # fcn: Linear(F2*2*N, 256) -> LeakyReLU -> Linear(256, 32) -> LeakyReLU -> Linear(32, 2)
        "w3": 0.1 * jax.random.normal(k3, (F2 * 2 * N, 256), jnp.float32),
        "b3": jnp.zeros((256,), jnp.float32),
        "w4": 0.1 * jax.random.normal(k4, (256, 32), jnp.float32),
        "b4": jnp.zeros((32,), jnp.float32),
        "w5": 0.1 * jax.random.normal(k5, (32, 2), jnp.float32),
        "b5": jnp.zeros((2,), jnp.float32),
    }

    out, eidx, opt_adj = bargrain_forward(params, x, t, edge_index, k_g,
                                          num_nodes=N, bz=BZ, neg_slope=NEG_SLOPE)
    out = jax.block_until_ready(out)
    jax.block_until_ready(opt_adj)

    assert out.shape == (BZ, 2) and out.dtype == jnp.float32
    assert opt_adj.shape == (N, N)
    print("KERNEL_OK")
</pallas_src>

<mosaic_0001>
module attributes {stable_mosaic.version = 11 : i64} {
  func.func @kernel(%arg0: i32, %arg1: memref<16x16xf32, #tpu.memory_space<vmem>>, %arg2: memref<16x8xf32, #tpu.memory_space<vmem>>, %arg3: memref<8x16xf32, #tpu.memory_space<vmem>>, %arg4: memref<1x16xf32, #tpu.memory_space<vmem>>, %arg5: memref<16x8xf32, #tpu.memory_space<vmem>>, %arg6: memref<1x8xf32, #tpu.memory_space<vmem>>, %arg7: memref<16x8xf32, #tpu.memory_space<vmem>>) attributes {dimension_semantics = [#tpu.dimension_semantics<arbitrary>], iteration_bounds = array<i64: 1>, scalar_prefetch = 0 : i64, scratch_operands = 0 : i64, tpu.core_type = #tpu.core_type<tc>, window_params = [{pipeline_mode = #tpu.pipeline_mode<synchronous>, transform_indices = @transform_0, window_bounds = array<i64: 16, 16>}, {pipeline_mode = #tpu.pipeline_mode<synchronous>, transform_indices = @transform_1, window_bounds = array<i64: 16, 8>}, {pipeline_mode = #tpu.pipeline_mode<synchronous>, transform_indices = @transform_2, window_bounds = array<i64: 8, 16>}, {pipeline_mode = #tpu.pipeline_mode<synchronous>, transform_indices = @transform_3, window_bounds = array<i64: 1, 16>}, {pipeline_mode = #tpu.pipeline_mode<synchronous>, transform_indices = @transform_4, window_bounds = array<i64: 16, 8>}, {pipeline_mode = #tpu.pipeline_mode<synchronous>, transform_indices = @transform_5, window_bounds = array<i64: 1, 8>}, {pipeline_mode = #tpu.pipeline_mode<synchronous>, transform_indices = @transform_6, window_bounds = array<i64: 16, 8>}]} {
    %c0 = arith.constant 0 : index
    %c0_0 = arith.constant 0 : index
    %0 = vector.load %arg1[%c0, %c0_0] : memref<16x16xf32, #tpu.memory_space<vmem>>, vector<16x16xf32>
    %c0_1 = arith.constant 0 : index
    %c0_2 = arith.constant 0 : index
    %1 = vector.load %arg2[%c0_1, %c0_2] : memref<16x8xf32, #tpu.memory_space<vmem>>, vector<16x8xf32>
    %c0_3 = arith.constant 0 : index
    %c0_4 = arith.constant 0 : index
    %2 = vector.load %arg3[%c0_3, %c0_4] : memref<8x16xf32, #tpu.memory_space<vmem>>, vector<8x16xf32>
    %c0_5 = arith.constant 0 : index
    %c0_6 = arith.constant 0 : index
    %3 = vector.load %arg4[%c0_5, %c0_6] : memref<1x16xf32, #tpu.memory_space<vmem>>, vector<1x16xf32>
    %c0_7 = arith.constant 0 : index
    %c0_8 = arith.constant 0 : index
    %4 = vector.load %arg5[%c0_7, %c0_8] : memref<16x8xf32, #tpu.memory_space<vmem>>, vector<16x8xf32>
    %c0_9 = arith.constant 0 : index
    %c0_10 = arith.constant 0 : index
    %5 = vector.load %arg6[%c0_9, %c0_10] : memref<1x8xf32, #tpu.memory_space<vmem>>, vector<1x8xf32>
    %6 = tpu.iota {dimensions = array<i32: 0>} : vector<16x16xi32>
    %7 = tpu.iota {dimensions = array<i32: 1>} : vector<16x16xi32>
    %8 = arith.cmpi eq, %6, %7 : vector<16x16xi32>
    %cst = arith.constant 1.000000e+00 : f32
    %cst_11 = arith.constant 0.000000e+00 : f32
    %9 = vector.broadcast %cst : f32 to vector<16x16xf32>
    %10 = vector.broadcast %cst_11 : f32 to vector<16x16xf32>
    %11 = arith.select %8, %9, %10 : vector<16x16xi1>, vector<16x16xf32>
    %12 = arith.maximumf %0, %11 : vector<16x16xf32>
    %cst_12 = arith.constant dense<0.000000e+00> : vector<16xf32>
    %13 = vector.multi_reduction <add>, %12, %cst_12 [0] : vector<16x16xf32> to vector<16xf32>
    %14 = vector.shape_cast %13 : vector<16xf32> to vector<1x16xf32>
    %cst_13 = arith.constant 0.000000e+00 : f32
    %15 = vector.broadcast %cst_13 : f32 to vector<1x16xf32>
    %16 = arith.cmpf ogt, %14, %15 : vector<1x16xf32>
    %17 = math.sqrt %14 : vector<1x16xf32>
    %cst_14 = arith.constant 1.000000e+00 : f32
    %18 = vector.broadcast %cst_14 : f32 to vector<1x16xf32>
    %19 = arith.divf %18, %17 : vector<1x16xf32>
    %cst_15 = arith.constant 0.000000e+00 : f32
    %20 = vector.broadcast %cst_15 : f32 to vector<1x16xf32>
    %21 = arith.select %16, %19, %20 : vector<1x16xi1>, vector<1x16xf32>
    %22 = vector.broadcast %21 : vector<1x16xf32> to vector<16x16xf32>
    %23 = arith.mulf %12, %22 : vector<16x16xf32>
    %24 = tpu.transpose %23, [1, 0] : vector<16x16xf32> -> vector<16x16xf32>
    %25 = vector.broadcast %21 : vector<1x16xf32> to vector<16x16xf32>
    %26 = arith.mulf %24, %25 : vector<16x16xf32>
    %cst_16 = arith.constant dense<0.000000e+00> : vector<16x16xf32>
    %27 = tpu.matmul %1, %2, %cst_16 {dimension_numbers = #tpu.dot_dimension_numbers<[1], [0], [0], [1], [0, 0, 1, 1], [], []>} : vector<16x8xf32>, vector<8x16xf32>, vector<16x16xf32> -> vector<16x16xf32>
    %cst_17 = arith.constant dense<0.000000e+00> : vector<16x16xf32>
    %28 = tpu.matmul %26, %27, %cst_17 {dimension_numbers = #tpu.dot_dimension_numbers<[1], [0], [0], [1], [0, 0, 1, 1], [], []>} : vector<16x16xf32>, vector<16x16xf32>, vector<16x16xf32> -> vector<16x16xf32>
    %29 = vector.broadcast %3 : vector<1x16xf32> to vector<16x16xf32>
    %30 = arith.addf %28, %29 : vector<16x16xf32>
    %cst_18 = arith.constant 0.000000e+00 : f32
    %31 = vector.broadcast %cst_18 : f32 to vector<16x16xf32>
    %32 = arith.maximumf %30, %31 : vector<16x16xf32>
    %cst_19 = arith.constant dense<0.000000e+00> : vector<16x8xf32>
    %33 = tpu.matmul %32, %4, %cst_19 {dimension_numbers = #tpu.dot_dimension_numbers<[1], [0], [0], [1], [0, 0, 1, 1], [], []>} : vector<16x16xf32>, vector<16x8xf32>, vector<16x8xf32> -> vector<16x8xf32>
    %cst_20 = arith.constant dense<0.000000e+00> : vector<16x8xf32>
    %34 = tpu.matmul %26, %33, %cst_20 {dimension_numbers = #tpu.dot_dimension_numbers<[1], [0], [0], [1], [0, 0, 1, 1], [], []>} : vector<16x16xf32>, vector<16x8xf32>, vector<16x8xf32> -> vector<16x8xf32>
    %35 = vector.broadcast %5 : vector<1x8xf32> to vector<16x8xf32>
    %36 = arith.addf %34, %35 : vector<16x8xf32>
    %c0_21 = arith.constant 0 : index
    %c0_22 = arith.constant 0 : index
    %37 = vector.load %arg7[%c0_21, %c0_22] : memref<16x8xf32, #tpu.memory_space<vmem>>, vector<16x8xf32>
    tpu.vector_store %arg7[%c0_21, %c0_22], %36 {strides = array<i32>} : memref<16x8xf32, #tpu.memory_space<vmem>>, vector<16x8xf32>,
    return
  }
  func.func @transform_0(%arg0: i32) -> (i32, i32) {
    %c0_i32 = arith.constant 0 : i32
    %c0_i32_0 = arith.constant 0 : i32
    %c0_i32_1 = arith.constant 0 : i32
    return %c0_i32, %c0_i32_0 : i32, i32
  }
  func.func @transform_1(%arg0: i32) -> (i32, i32) {
    %c0_i32 = arith.constant 0 : i32
    %c0_i32_0 = arith.constant 0 : i32
    %c0_i32_1 = arith.constant 0 : i32
    return %c0_i32, %c0_i32_0 : i32, i32
  }
  func.func @transform_2(%arg0: i32) -> (i32, i32) {
    %c0_i32 = arith.constant 0 : i32
    %c0_i32_0 = arith.constant 0 : i32
    %c0_i32_1 = arith.constant 0 : i32
    return %c0_i32, %c0_i32_0 : i32, i32
  }
  func.func @transform_3(%arg0: i32) -> (i32, i32) {
    %c0_i32 = arith.constant 0 : i32
    %c0_i32_0 = arith.constant 0 : i32
    %c0_i32_1 = arith.constant 0 : i32
    return %c0_i32, %c0_i32_0 : i32, i32
  }
  func.func @transform_4(%arg0: i32) -> (i32, i32) {
    %c0_i32 = arith.constant 0 : i32
    %c0_i32_0 = arith.constant 0 : i32
    %c0_i32_1 = arith.constant 0 : i32
    return %c0_i32, %c0_i32_0 : i32, i32
  }
  func.func @transform_5(%arg0: i32) -> (i32, i32) {
    %c0_i32 = arith.constant 0 : i32
    %c0_i32_0 = arith.constant 0 : i32
    %c0_i32_1 = arith.constant 0 : i32
    return %c0_i32, %c0_i32_0 : i32, i32
  }
  func.func @transform_6(%arg0: i32) -> (i32, i32) {
    %c0_i32 = arith.constant 0 : i32
    %c0_i32_0 = arith.constant 0 : i32
    %c0_i32_1 = arith.constant 0 : i32
    return %c0_i32, %c0_i32_0 : i32, i32
  }
}

module attributes {stable_mosaic.version = 11 : i64} {
  func.func @kernel(%arg0: i32, %arg1: memref<2x64xf32, #tpu.memory_space<vmem>>, %arg2: memref<2x64xf32, #tpu.memory_space<vmem>>, %arg3: memref<64x256xf32, #tpu.memory_space<vmem>>, %arg4: memref<64x256xf32, #tpu.memory_space<vmem>>, %arg5: memref<1x256xf32, #tpu.memory_space<vmem>>, %arg6: memref<256x32xf32, #tpu.memory_space<vmem>>, %arg7: memref<1x32xf32, #tpu.memory_space<vmem>>, %arg8: memref<32x2xf32, #tpu.memory_space<vmem>>, %arg9: memref<1x2xf32, #tpu.memory_space<vmem>>, %arg10: memref<2x2xf32, #tpu.memory_space<vmem>>) attributes {dimension_semantics = [#tpu.dimension_semantics<arbitrary>], iteration_bounds = array<i64: 1>, scalar_prefetch = 0 : i64, scratch_operands = 0 : i64, tpu.core_type = #tpu.core_type<tc>, window_params = [{pipeline_mode = #tpu.pipeline_mode<synchronous>, transform_indices = @transform_0, window_bounds = array<i64: 2, 64>}, {pipeline_mode = #tpu.pipeline_mode<synchronous>, transform_indices = @transform_1, window_bounds = array<i64: 2, 64>}, {pipeline_mode = #tpu.pipeline_mode<synchronous>, transform_indices = @transform_2, window_bounds = array<i64: 64, 256>}, {pipeline_mode = #tpu.pipeline_mode<synchronous>, transform_indices = @transform_3, window_bounds = array<i64: 64, 256>}, {pipeline_mode = #tpu.pipeline_mode<synchronous>, transform_indices = @transform_4, window_bounds = array<i64: 1, 256>}, {pipeline_mode = #tpu.pipeline_mode<synchronous>, transform_indices = @transform_5, window_bounds = array<i64: 256, 32>}, {pipeline_mode = #tpu.pipeline_mode<synchronous>, transform_indices = @transform_6, window_bounds = array<i64: 1, 32>}, {pipeline_mode = #tpu.pipeline_mode<synchronous>, transform_indices = @transform_7, window_bounds = array<i64: 32, 2>}, {pipeline_mode = #tpu.pipeline_mode<synchronous>, transform_indices = @transform_8, window_bounds = array<i64: 1, 2>}, {pipeline_mode = #tpu.pipeline_mode<synchronous>, transform_indices = @transform_9, window_bounds = array<i64: 2, 2>}]} {
    %c0 = arith.constant 0 : index
    %c0_0 = arith.constant 0 : index
    %0 = vector.load %arg1[%c0, %c0_0] : memref<2x64xf32, #tpu.memory_space<vmem>>, vector<2x64xf32>
    %c0_1 = arith.constant 0 : index
    %c0_2 = arith.constant 0 : index
    %1 = vector.load %arg3[%c0_1, %c0_2] : memref<64x256xf32, #tpu.memory_space<vmem>>, vector<64x256xf32>
    %cst = arith.constant dense<0.000000e+00> : vector<2x256xf32>
    %2 = tpu.matmul %0, %1, %cst {dimension_numbers = #tpu.dot_dimension_numbers<[1], [0], [0], [1], [0, 0, 1, 1], [], []>} : vector<2x64xf32>, vector<64x256xf32>, vector<2x256xf32> -> vector<2x256xf32>
    %c0_3 = arith.constant 0 : index
    %c0_4 = arith.constant 0 : index
    %3 = vector.load %arg2[%c0_3, %c0_4] : memref<2x64xf32, #tpu.memory_space<vmem>>, vector<2x64xf32>
    %c0_5 = arith.constant 0 : index
    %c0_6 = arith.constant 0 : index
    %4 = vector.load %arg4[%c0_5, %c0_6] : memref<64x256xf32, #tpu.memory_space<vmem>>, vector<64x256xf32>
    %cst_7 = arith.constant dense<0.000000e+00> : vector<2x256xf32>
    %5 = tpu.matmul %3, %4, %cst_7 {dimension_numbers = #tpu.dot_dimension_numbers<[1], [0], [0], [1], [0, 0, 1, 1], [], []>} : vector<2x64xf32>, vector<64x256xf32>, vector<2x256xf32> -> vector<2x256xf32>
    %6 = arith.addf %2, %5 : vector<2x256xf32>
    %c0_8 = arith.constant 0 : index
    %c0_9 = arith.constant 0 : index
    %7 = vector.load %arg5[%c0_8, %c0_9] : memref<1x256xf32, #tpu.memory_space<vmem>>, vector<1x256xf32>
    %8 = vector.broadcast %7 : vector<1x256xf32> to vector<2x256xf32>
    %9 = arith.addf %6, %8 : vector<2x256xf32>
    %cst_10 = arith.constant 0.000000e+00 : f32
    %10 = vector.broadcast %cst_10 : f32 to vector<2x256xf32>
    %11 = arith.cmpf oge, %9, %10 : vector<2x256xf32>
    %cst_11 = arith.constant 2.000000e-01 : f32
    %12 = vector.broadcast %cst_11 : f32 to vector<2x256xf32>
    %13 = arith.mulf %12, %9 : vector<2x256xf32>
    %14 = arith.select %11, %9, %13 : vector<2x256xi1>, vector<2x256xf32>
    %c0_12 = arith.constant 0 : index
    %c0_13 = arith.constant 0 : index
    %15 = vector.load %arg6[%c0_12, %c0_13] : memref<256x32xf32, #tpu.memory_space<vmem>>, vector<256x32xf32>
    %cst_14 = arith.constant dense<0.000000e+00> : vector<2x32xf32>
    %16 = tpu.matmul %14, %15, %cst_14 {dimension_numbers = #tpu.dot_dimension_numbers<[1], [0], [0], [1], [0, 0, 1, 1], [], []>} : vector<2x256xf32>, vector<256x32xf32>, vector<2x32xf32> -> vector<2x32xf32>
    %c0_15 = arith.constant 0 : index
    %c0_16 = arith.constant 0 : index
    %17 = vector.load %arg7[%c0_15, %c0_16] : memref<1x32xf32, #tpu.memory_space<vmem>>, vector<1x32xf32>
    %18 = vector.broadcast %17 : vector<1x32xf32> to vector<2x32xf32>
    %19 = arith.addf %16, %18 : vector<2x32xf32>
    %cst_17 = arith.constant 0.000000e+00 : f32
    %20 = vector.broadcast %cst_17 : f32 to vector<2x32xf32>
    %21 = arith.cmpf oge, %19, %20 : vector<2x32xf32>
    %cst_18 = arith.constant 2.000000e-01 : f32
    %22 = vector.broadcast %cst_18 : f32 to vector<2x32xf32>
    %23 = arith.mulf %22, %19 : vector<2x32xf32>
    %24 = arith.select %21, %19, %23 : vector<2x32xi1>, vector<2x32xf32>
    %c0_19 = arith.constant 0 : index
    %c0_20 = arith.constant 0 : index
    %25 = vector.load %arg8[%c0_19, %c0_20] : memref<32x2xf32, #tpu.memory_space<vmem>>, vector<32x2xf32>
    %cst_21 = arith.constant dense<0.000000e+00> : vector<2x2xf32>
    %26 = tpu.matmul %24, %25, %cst_21 {dimension_numbers = #tpu.dot_dimension_numbers<[1], [0], [0], [1], [0, 0, 1, 1], [], []>} : vector<2x32xf32>, vector<32x2xf32>, vector<2x2xf32> -> vector<2x2xf32>
    %c0_22 = arith.constant 0 : index
    %c0_23 = arith.constant 0 : index
    %27 = vector.load %arg9[%c0_22, %c0_23] : memref<1x2xf32, #tpu.memory_space<vmem>>, vector<1x2xf32>
    %28 = vector.broadcast %27 : vector<1x2xf32> to vector<2x2xf32>
    %29 = arith.addf %26, %28 : vector<2x2xf32>
    %c0_24 = arith.constant 0 : index
    %c0_25 = arith.constant 0 : index
    %30 = vector.load %arg10[%c0_24, %c0_25] : memref<2x2xf32, #tpu.memory_space<vmem>>, vector<2x2xf32>
    tpu.vector_store %arg10[%c0_24, %c0_25], %29 {strides = array<i32>} : memref<2x2xf32, #tpu.memory_space<vmem>>, vector<2x2xf32>,
    return
  }
  func.func @transform_0(%arg0: i32) -> (i32, i32) {
    %c0_i32 = arith.constant 0 : i32
    %c0_i32_0 = arith.constant 0 : i32
    %c0_i32_1 = arith.constant 0 : i32
    return %c0_i32, %c0_i32_0 : i32, i32
  }
  func.func @transform_1(%arg0: i32) -> (i32, i32) {
    %c0_i32 = arith.constant 0 : i32
    %c0_i32_0 = arith.constant 0 : i32
    %c0_i32_1 = arith.constant 0 : i32
    return %c0_i32, %c0_i32_0 : i32, i32
  }
  func.func @transform_2(%arg0: i32) -> (i32, i32) {
    %c0_i32 = arith.constant 0 : i32
    %c0_i32_0 = arith.constant 0 : i32
    %c0_i32_1 = arith.constant 0 : i32
    return %c0_i32, %c0_i32_0 : i32, i32
  }
  func.func @transform_3(%arg0: i32) -> (i32, i32) {
    %c0_i32 = arith.constant 0 : i32
    %c0_i32_0 = arith.constant 0 : i32
    %c0_i32_1 = arith.constant 0 : i32
    return %c0_i32, %c0_i32_0 : i32, i32
  }
  func.func @transform_4(%arg0: i32) -> (i32, i32) {
    %c0_i32 = arith.constant 0 : i32
    %c0_i32_0 = arith.constant 0 : i32
    %c0_i32_1 = arith.constant 0 : i32
    return %c0_i32, %c0_i32_0 : i32, i32
  }
  func.func @transform_5(%arg0: i32) -> (i32, i32) {
    %c0_i32 = arith.constant 0 : i32
    %c0_i32_0 = arith.constant 0 : i32
    %c0_i32_1 = arith.constant 0 : i32
    return %c0_i32, %c0_i32_0 : i32, i32
  }
  func.func @transform_6(%arg0: i32) -> (i32, i32) {
    %c0_i32 = arith.constant 0 : i32
    %c0_i32_0 = arith.constant 0 : i32
    %c0_i32_1 = arith.constant 0 : i32
    return %c0_i32, %c0_i32_0 : i32, i32
  }
  func.func @transform_7(%arg0: i32) -> (i32, i32) {
    %c0_i32 = arith.constant 0 : i32
    %c0_i32_0 = arith.constant 0 : i32
    %c0_i32_1 = arith.constant 0 : i32
    return %c0_i32, %c0_i32_0 : i32, i32
  }
  func.func @transform_8(%arg0: i32) -> (i32, i32) {
    %c0_i32 = arith.constant 0 : i32
    %c0_i32_0 = arith.constant 0 : i32
    %c0_i32_1 = arith.constant 0 : i32
    return %c0_i32, %c0_i32_0 : i32, i32
  }
  func.func @transform_9(%arg0: i32) -> (i32, i32) {
    %c0_i32 = arith.constant 0 : i32
    %c0_i32_0 = arith.constant 0 : i32
    %c0_i32_1 = arith.constant 0 : i32
    return %c0_i32, %c0_i32_0 : i32, i32
  }
}

module attributes {stable_mosaic.version = 11 : i64} {
  func.func @_subject_kernel(%arg0: i32, %arg1: memref<1x8x8xf32, #tpu.memory_space<vmem>>, %arg2: memref<1x8x8xf32, #tpu.memory_space<vmem>>, %arg3: memref<1x8x8xf32, #tpu.memory_space<vmem>>, %arg4: memref<1x8x8xf32, #tpu.memory_space<vmem>>, %arg5: memref<1x8xf32, #tpu.memory_space<vmem>>, %arg6: memref<8x1xf32, #tpu.memory_space<vmem>>, %arg7: memref<8x16xf32, #tpu.memory_space<vmem>>, %arg8: memref<1x16xf32, #tpu.memory_space<vmem>>, %arg9: memref<16x8xf32, #tpu.memory_space<vmem>>, %arg10: memref<1x8xf32, #tpu.memory_space<vmem>>, %arg11: memref<1x8x8xf32, #tpu.memory_space<vmem>>, %arg12: memref<1x8x8xf32, #tpu.memory_space<vmem>>) attributes {dimension_semantics = [#tpu.dimension_semantics<parallel>], iteration_bounds = array<i64: 2>, scalar_prefetch = 0 : i64, scratch_operands = 0 : i64, tpu.core_type = #tpu.core_type<tc>, window_params = [{transform_indices = @transform_0, window_bounds = array<i64: 1, 8, 8>}, {transform_indices = @transform_1, window_bounds = array<i64: 1, 8, 8>}, {transform_indices = @transform_2, window_bounds = array<i64: 1, 8, 8>}, {transform_indices = @transform_3, window_bounds = array<i64: 1, 8, 8>}, {pipeline_mode = #tpu.pipeline_mode<synchronous>, transform_indices = @transform_4, window_bounds = array<i64: 1, 8>}, {pipeline_mode = #tpu.pipeline_mode<synchronous>, transform_indices = @transform_5, window_bounds = array<i64: 8, 1>}, {pipeline_mode = #tpu.pipeline_mode<synchronous>, transform_indices = @transform_6, window_bounds = array<i64: 8, 16>}, {pipeline_mode = #tpu.pipeline_mode<synchronous>, transform_indices = @transform_7, window_bounds = array<i64: 1, 16>}, {pipeline_mode = #tpu.pipeline_mode<synchronous>, transform_indices = @transform_8, window_bounds = array<i64: 16, 8>}, {pipeline_mode = #tpu.pipeline_mode<synchronous>, transform_indices = @transform_9, window_bounds = array<i64: 1, 8>}, {transform_indices = @transform_10, window_bounds = array<i64: 1, 8, 8>}, {transform_indices = @transform_11, window_bounds = array<i64: 1, 8, 8>}]} {
    %c0 = arith.constant 0 : index
    %c0_0 = arith.constant 0 : index
    %c0_1 = arith.constant 0 : index
    %0 = vector.load %arg1[%c0, %c0_0, %c0_1] : memref<1x8x8xf32, #tpu.memory_space<vmem>>, vector<1x8x8xf32>
    %1 = vector.shape_cast %0 : vector<1x8x8xf32> to vector<8x8xf32>
    %c0_2 = arith.constant 0 : index
    %c0_3 = arith.constant 0 : index
    %c0_4 = arith.constant 0 : index
    %2 = vector.load %arg2[%c0_2, %c0_3, %c0_4] : memref<1x8x8xf32, #tpu.memory_space<vmem>>, vector<1x8x8xf32>
    %3 = vector.shape_cast %2 : vector<1x8x8xf32> to vector<8x8xf32>
    %c0_5 = arith.constant 0 : index
    %c0_6 = arith.constant 0 : index
    %c0_7 = arith.constant 0 : index
    %4 = vector.load %arg3[%c0_5, %c0_6, %c0_7] : memref<1x8x8xf32, #tpu.memory_space<vmem>>, vector<1x8x8xf32>
    %5 = vector.shape_cast %4 : vector<1x8x8xf32> to vector<8x8xf32>
    %c0_8 = arith.constant 0 : index
    %c0_9 = arith.constant 0 : index
    %c0_10 = arith.constant 0 : index
    %6 = vector.load %arg4[%c0_8, %c0_9, %c0_10] : memref<1x8x8xf32, #tpu.memory_space<vmem>>, vector<1x8x8xf32>
    %7 = vector.shape_cast %6 : vector<1x8x8xf32> to vector<8x8xf32>
    %cst = arith.constant 0.000000e+00 : f32
    %8 = vector.broadcast %cst : f32 to vector<8x8xf32>
    %9 = arith.maximumf %1, %8 : vector<8x8xf32>
    %cst_11 = arith.constant 0.000000e+00 : f32
    %10 = vector.broadcast %cst_11 : f32 to vector<8x8xf32>
    %11 = arith.maximumf %3, %10 : vector<8x8xf32>
    %c0_12 = arith.constant 0 : index
    %c0_13 = arith.constant 0 : index
    %12 = vector.load %arg5[%c0_12, %c0_13] : memref<1x8xf32, #tpu.memory_space<vmem>>, vector<1x8xf32>
    %13 = vector.broadcast %12 : vector<1x8xf32> to vector<8x8xf32>
    %14 = arith.mulf %9, %13 : vector<8x8xf32>
    %cst_14 = arith.constant dense<0.000000e+00> : vector<8xf32>
    %15 = vector.multi_reduction <add>, %14, %cst_14 [1] : vector<8x8xf32> to vector<8xf32>
    %16 = vector.shape_cast %15 : vector<8xf32> to vector<8x1xf32>
    %c0_15 = arith.constant 0 : index
    %c0_16 = arith.constant 0 : index
    %17 = vector.load %arg6[%c0_15, %c0_16] : memref<8x1xf32, #tpu.memory_space<vmem>>, vector<8x1xf32>
    %18 = vector.broadcast %17 : vector<8x1xf32> to vector<8x8xf32>
    %19 = arith.mulf %11, %18 : vector<8x8xf32>
    %cst_17 = arith.constant dense<0.000000e+00> : vector<8xf32>
    %20 = vector.multi_reduction <add>, %19, %cst_17 [0] : vector<8x8xf32> to vector<8xf32>
    %21 = vector.shape_cast %20 : vector<8xf32> to vector<1x8xf32>
    %22 = vector.broadcast %16 : vector<8x1xf32> to vector<8x8xf32>
    %23 = vector.broadcast %21 : vector<1x8xf32> to vector<8x8xf32>
    %24 = arith.addf %22, %23 : vector<8x8xf32>
    %25 = arith.addf %24, %7 : vector<8x8xf32>
    %cst_18 = arith.constant 0.000000e+00 : f32
    %26 = vector.broadcast %cst_18 : f32 to vector<8x8xf32>
    %27 = arith.cmpf oge, %25, %26 : vector<8x8xf32>
    %cst_19 = arith.constant 1.000000e+00 : f32
    %cst_20 = arith.constant 0.000000e+00 : f32
    %28 = vector.broadcast %cst_19 : f32 to vector<8x8xf32>
    %29 = vector.broadcast %cst_20 : f32 to vector<8x8xf32>
    %30 = arith.select %27, %28, %29 : vector<8x8xi1>, vector<8x8xf32>
    %c0_21 = arith.constant 0 : index
    %c0_22 = arith.constant 0 : index
    %c0_23 = arith.constant 0 : index
    %31 = vector.load %arg12[%c0_21, %c0_22, %c0_23] : memref<1x8x8xf32, #tpu.memory_space<vmem>>, vector<1x8x8xf32>
    %32 = vector.shape_cast %31 : vector<1x8x8xf32> to vector<8x8xf32>
    %33 = vector.shape_cast %30 : vector<8x8xf32> to vector<1x8x8xf32>
    tpu.vector_store %arg12[%c0_21, %c0_22, %c0_23], %33 {strides = array<i32>} : memref<1x8x8xf32, #tpu.memory_space<vmem>>, vector<1x8x8xf32>,
    %c0_24 = arith.constant 0 : index
    %c0_25 = arith.constant 0 : index
    %34 = vector.load %arg7[%c0_24, %c0_25] : memref<8x16xf32, #tpu.memory_space<vmem>>, vector<8x16xf32>
    %c0_26 = arith.constant 0 : index
    %c0_27 = arith.constant 0 : index
    %35 = vector.load %arg8[%c0_26, %c0_27] : memref<1x16xf32, #tpu.memory_space<vmem>>, vector<1x16xf32>
    %c0_28 = arith.constant 0 : index
    %c0_29 = arith.constant 0 : index
    %36 = vector.load %arg9[%c0_28, %c0_29] : memref<16x8xf32, #tpu.memory_space<vmem>>, vector<16x8xf32>
    %c0_30 = arith.constant 0 : index
    %c0_31 = arith.constant 0 : index
    %37 = vector.load %arg10[%c0_30, %c0_31] : memref<1x8xf32, #tpu.memory_space<vmem>>, vector<1x8xf32>
    %38 = tpu.iota {dimensions = array<i32: 0>} : vector<8x8xi32>
    %39 = tpu.iota {dimensions = array<i32: 1>} : vector<8x8xi32>
    %40 = arith.cmpi eq, %38, %39 : vector<8x8xi32>
    %cst_32 = arith.constant 1.000000e+00 : f32
    %cst_33 = arith.constant 0.000000e+00 : f32
    %41 = vector.broadcast %cst_32 : f32 to vector<8x8xf32>
    %42 = vector.broadcast %cst_33 : f32 to vector<8x8xf32>
    %43 = arith.select %40, %41, %42 : vector<8x8xi1>, vector<8x8xf32>
    %44 = arith.maximumf %30, %43 : vector<8x8xf32>
    %cst_34 = arith.constant dense<0.000000e+00> : vector<8xf32>
    %45 = vector.multi_reduction <add>, %44, %cst_34 [0] : vector<8x8xf32> to vector<8xf32>
    %46 = vector.shape_cast %45 : vector<8xf32> to vector<1x8xf32>
    %cst_35 = arith.constant 0.000000e+00 : f32
    %47 = vector.broadcast %cst_35 : f32 to vector<1x8xf32>
    %48 = arith.cmpf ogt, %46, %47 : vector<1x8xf32>
    %49 = math.sqrt %46 : vector<1x8xf32>
    %cst_36 = arith.constant 1.000000e+00 : f32
    %50 = vector.broadcast %cst_36 : f32 to vector<1x8xf32>
    %51 = arith.divf %50, %49 : vector<1x8xf32>
    %cst_37 = arith.constant 0.000000e+00 : f32
    %52 = vector.broadcast %cst_37 : f32 to vector<1x8xf32>
    %53 = arith.select %48, %51, %52 : vector<1x8xi1>, vector<1x8xf32>
    %54 = vector.broadcast %53 : vector<1x8xf32> to vector<8x8xf32>
    %55 = arith.mulf %44, %54 : vector<8x8xf32>
    %56 = tpu.transpose %55, [1, 0] : vector<8x8xf32> -> vector<8x8xf32>
    %57 = vector.broadcast %53 : vector<1x8xf32> to vector<8x8xf32>
    %58 = arith.mulf %56, %57 : vector<8x8xf32>
    %cst_38 = arith.constant dense<0.000000e+00> : vector<8x16xf32>
    %59 = tpu.matmul %5, %34, %cst_38 {dimension_numbers = #tpu.dot_dimension_numbers<[1], [0], [0], [1], [0, 0, 1, 1], [], []>} : vector<8x8xf32>, vector<8x16xf32>, vector<8x16xf32> -> vector<8x16xf32>
    %cst_39 = arith.constant dense<0.000000e+00> : vector<8x16xf32>
    %60 = tpu.matmul %58, %59, %cst_39 {dimension_numbers = #tpu.dot_dimension_numbers<[1], [0], [0], [1], [0, 0, 1, 1], [], []>} : vector<8x8xf32>, vector<8x16xf32>, vector<8x16xf32> -> vector<8x16xf32>
    %61 = vector.broadcast %35 : vector<1x16xf32> to vector<8x16xf32>
    %62 = arith.addf %60, %61 : vector<8x16xf32>
    %cst_40 = arith.constant 0.000000e+00 : f32
    %63 = vector.broadcast %cst_40 : f32 to vector<8x16xf32>
    %64 = arith.maximumf %62, %63 : vector<8x16xf32>
    %cst_41 = arith.constant dense<0.000000e+00> : vector<8x8xf32>
    %65 = tpu.matmul %64, %36, %cst_41 {dimension_numbers = #tpu.dot_dimension_numbers<[1], [0], [0], [1], [0, 0, 1, 1], [], []>} : vector<8x16xf32>, vector<16x8xf32>, vector<8x8xf32> -> vector<8x8xf32>
    %cst_42 = arith.constant dense<0.000000e+00> : vector<8x8xf32>
    %66 = tpu.matmul %58, %65, %cst_42 {dimension_numbers = #tpu.dot_dimension_numbers<[1], [0], [0], [1], [0, 0, 1, 1], [], []>} : vector<8x8xf32>, vector<8x8xf32>, vector<8x8xf32> -> vector<8x8xf32>
    %67 = vector.broadcast %37 : vector<1x8xf32> to vector<8x8xf32>
    %68 = arith.addf %66, %67 : vector<8x8xf32>
    %c0_43 = arith.constant 0 : index
    %c0_44 = arith.constant 0 : index
    %c0_45 = arith.constant 0 : index
    %69 = vector.load %arg11[%c0_43, %c0_44, %c0_45] : memref<1x8x8xf32, #tpu.memory_space<vmem>>, vector<1x8x8xf32>
    %70 = vector.shape_cast %69 : vector<1x8x8xf32> to vector<8x8xf32>
    %71 = vector.shape_cast %68 : vector<8x8xf32> to vector<1x8x8xf32>
    tpu.vector_store %arg11[%c0_43, %c0_44, %c0_45], %71 {strides = array<i32>} : memref<1x8x8xf32, #tpu.memory_space<vmem>>, vector<1x8x8xf32>,
    return
  }
  func.func @transform_0(%arg0: i32) -> (i32, i32, i32) {
    %c0_i32 = arith.constant 0 : i32
    %c0_i32_0 = arith.constant 0 : i32
    %c0_i32_1 = arith.constant 0 : i32
    return %arg0, %c0_i32, %c0_i32_0 : i32, i32, i32
  }
  func.func @transform_1(%arg0: i32) -> (i32, i32, i32) {
    %c0_i32 = arith.constant 0 : i32
    %c0_i32_0 = arith.constant 0 : i32
    %c0_i32_1 = arith.constant 0 : i32
    return %arg0, %c0_i32, %c0_i32_0 : i32, i32, i32
  }
  func.func @transform_2(%arg0: i32) -> (i32, i32, i32) {
    %c0_i32 = arith.constant 0 : i32
    %c0_i32_0 = arith.constant 0 : i32
    %c0_i32_1 = arith.constant 0 : i32
    return %arg0, %c0_i32, %c0_i32_0 : i32, i32, i32
  }
  func.func @transform_3(%arg0: i32) -> (i32, i32, i32) {
    %c0_i32 = arith.constant 0 : i32
    %c0_i32_0 = arith.constant 0 : i32
    %c0_i32_1 = arith.constant 0 : i32
    return %arg0, %c0_i32, %c0_i32_0 : i32, i32, i32
  }
  func.func @transform_4(%arg0: i32) -> (i32, i32) {
    %c0_i32 = arith.constant 0 : i32
    %c0_i32_0 = arith.constant 0 : i32
    %c0_i32_1 = arith.constant 0 : i32
    return %c0_i32, %c0_i32_0 : i32, i32
  }
  func.func @transform_5(%arg0: i32) -> (i32, i32) {
    %c0_i32 = arith.constant 0 : i32
    %c0_i32_0 = arith.constant 0 : i32
    %c0_i32_1 = arith.constant 0 : i32
    return %c0_i32, %c0_i32_0 : i32, i32
  }
  func.func @transform_6(%arg0: i32) -> (i32, i32) {
    %c0_i32 = arith.constant 0 : i32
    %c0_i32_0 = arith.constant 0 : i32
    %c0_i32_1 = arith.constant 0 : i32
    return %c0_i32, %c0_i32_0 : i32, i32
  }
  func.func @transform_7(%arg0: i32) -> (i32, i32) {
    %c0_i32 = arith.constant 0 : i32
    %c0_i32_0 = arith.constant 0 : i32
    %c0_i32_1 = arith.constant 0 : i32
    return %c0_i32, %c0_i32_0 : i32, i32
  }
  func.func @transform_8(%arg0: i32) -> (i32, i32) {
    %c0_i32 = arith.constant 0 : i32
    %c0_i32_0 = arith.constant 0 : i32
    %c0_i32_1 = arith.constant 0 : i32
    return %c0_i32, %c0_i32_0 : i32, i32
  }
  func.func @transform_9(%arg0: i32) -> (i32, i32) {
    %c0_i32 = arith.constant 0 : i32
    %c0_i32_0 = arith.constant 0 : i32
    %c0_i32_1 = arith.constant 0 : i32
    return %c0_i32, %c0_i32_0 : i32, i32
  }
  func.func @transform_10(%arg0: i32) -> (i32, i32, i32) {
    %c0_i32 = arith.constant 0 : i32
    %c0_i32_0 = arith.constant 0 : i32
    %c0_i32_1 = arith.constant 0 : i32
    return %arg0, %c0_i32, %c0_i32_0 : i32, i32, i32
  }
  func.func @transform_11(%arg0: i32) -> (i32, i32, i32) {
    %c0_i32 = arith.constant 0 : i32
    %c0_i32_0 = arith.constant 0 : i32
    %c0_i32_1 = arith.constant 0 : i32
    return %arg0, %c0_i32, %c0_i32_0 : i32, i32, i32
  }
}

</mosaic_0001>

<llo_original>
// kernel: sub.1
$region0: #{sub.1}
  #allocation0 [shape = 's32[1]{0}', space=sflag, size = 0x4, scoped, tag = 'scoped memory for sub.1']
  %s0 = inlined_call_operand.vmem [shape: f32[8,1], index: 0, kind: input, shape index: {}]
  %s1 = inlined_call_operand.vmem [shape: f32[8,1], index: 1, kind: input, shape index: {}]
  %s2 = inlined_call_operand.vmem [shape: f32[8,1], index: 2, kind: output, shape index: {}]
  %v3 = vld [vmem:[%s0] sm:$0xff]
  %v4 = vld [vmem:[%s1] sm:$0xff]
  %5 = xla_tuple %v3, %v4
  %6 = xla_tuple %5
  %v7 = vsub.f32 %v3, %v4
  %8 = xla_tuple %v7
  %9 = vst [vmem:[%s2] sm:$0xff] %v7

// kernel: bargrain_forward.4
$region0: #{bargrain_forward.4}
  #allocation0 [shape = 'u32[]', space=smem, size = 0x4, offset = 0x4, fixed_abs, tag = 'smem constant byte address 0x4 - core index']
  #allocation1 [shape = 'u32[144,128]{1,0:T(1,128)}', space=vmem, size = 0x12000, scoped, tag = 'internal scratch']
  %s0 = inlined_call_operand.vmem [shape: f32[16,16], index: 0, kind: input, shape index: {}]
  %s1 = inlined_call_operand.vmem [shape: f32[16,8], index: 1, kind: input, shape index: {}]
  %s2 = inlined_call_operand.vmem [shape: f32[8,16], index: 2, kind: input, shape index: {}]
  %s3 = inlined_call_operand.vmem [shape: f32[1,16], index: 3, kind: input, shape index: {}]
  %s4 = inlined_call_operand.vmem [shape: f32[16,8], index: 4, kind: input, shape index: {}]
  %s5 = inlined_call_operand.vmem [shape: f32[1,8], index: 5, kind: input, shape index: {}]
  %s6 = inlined_call_operand.vmem [shape: f32[16,8], index: 6, kind: output, shape index: {}]
  %s7 = sld [smem:[#allocation0]]
  $region34: #{bargrain_forward.4} parent=0
    _
  %s9 = ssub.s32 1, %s7
  %s10 = scalar_select 0, %s9, %s7
  // Predicated region
  $region2: #{bargrain_forward.4} parent=0 // pred_check
    _
  $region3: #{bargrain_forward.4} parent=0 // pred_check_branch
    %12 = sbr.rel (0) target = $region5
  $region4: #{bargrain_forward.4} parent=0 // pred_region
    _
  $region5: #{bargrain_forward.4} parent=0 // pred_fallthru
    _
  // Predicated region
  $region6: #{bargrain_forward.4} parent=0 // pred_check
    _
  $region7: #{bargrain_forward.4} parent=0 // pred_check_branch
    %14 = sbr.rel (0) target = $region9
  $region8: #{bargrain_forward.4} parent=0 // pred_region
    _
  $region9: #{bargrain_forward.4} parent=0 // pred_fallthru
    _
  // Predicated region
  $region10: #{bargrain_forward.4} parent=0 // pred_check
    _
  $region11: #{bargrain_forward.4} parent=0 // pred_check_branch
    %16 = sbr.rel (0) target = $region13
  $region12: #{bargrain_forward.4} parent=0 // pred_region
    _
  $region13: #{bargrain_forward.4} parent=0 // pred_fallthru
    _
  // Predicated region
  $region14: #{bargrain_forward.4} parent=0 // pred_check
    _
  $region15: #{bargrain_forward.4} parent=0 // pred_check_branch
    %18 = sbr.rel (0) target = $region17
  $region16: #{bargrain_forward.4} parent=0 // pred_region
    _
  $region17: #{bargrain_forward.4} parent=0 // pred_fallthru
    _
  // Predicated region
  $region18: #{bargrain_forward.4} parent=0 // pred_check
    _
  $region19: #{bargrain_forward.4} parent=0 // pred_check_branch
    %20 = sbr.rel (0) target = $region21
  $region20: #{bargrain_forward.4} parent=0 // pred_region
    _
  $region21: #{bargrain_forward.4} parent=0 // pred_fallthru
    _
  // Predicated region
  $region22: #{bargrain_forward.4} parent=0 // pred_check
    _
  $region23: #{bargrain_forward.4} parent=0 // pred_check_branch
    %22 = sbr.rel (0) target = $region25
  $region24: #{bargrain_forward.4} parent=0 // pred_region
    _
  $region25: #{bargrain_forward.4} parent=0 // pred_fallthru
    _
  %v23 = vld [vmem:[%s0] sm:$0xff]
  %v24 = vld [vmem:[%s0 + $0x8] sm:$0xff]
  %v25 = vld [vmem:[%s1] sm:$0xff]
  %v26 = vld [vmem:[%s1 + $0x8] sm:$0xff]
  %v27 = vld [vmem:[%s2] sm:$0xff]
  %v28 = vld [vmem:[%s3] sm:$0x1]
  %v29 = vld [vmem:[%s4] sm:$0xff]
  %v30 = vld [vmem:[%s4 + $0x8] sm:$0xff]
  %v31 = vld [vmem:[%s5] sm:$0x1]
  %v32 = vlaneseq
  %v33 = vshrl.u32 %v32, 7
  %v34 = vadd.s32 %v33, 8
  %v35 = vlaneseq
  %v36 = vand.u32 %v35, 127
  %vm37 = vcmp.eq.s32.totalorder %v33, %v36
  %vm38 = vcmp.eq.s32.totalorder %v34, %v36
  %v39 = vsel %vm37, 1.0, 0.0
  %v40 = vsel %vm38, 1.0, 0.0
  %v41 = vmax.f32 %v23, %v39
  %v42 = vmax.f32 %v24, %v40
  %vm43 = vcmask 130048
  %v44 = vsel %vm43, %v41, 0.0
  %v45 = vsel %vm43, %v42, 0.0
  %v46 = vadd.f32 %v44, %v45
  %v47 = vrot.slane %v46, 4
  %v48 = vadd.f32 %v46, %v47
  %v49 = vrot.slane %v48, 2
  %v50 = vadd.f32 %v48, %v49
  %v51 = vrot.slane %v50, 1
  %v52 = vadd.f32 %v50, %v51
  %vm53 = vcmp.gt.f32.partialorder %v52, 0.0
  %v54 = vrsqrt.pop %v52
  %v55 = vmul.f32 %v52, %v54
  %vm56 = vcmp.eq.f32.partialorder %v52, inf
  %v57 = vsel %vm56, %v52, %v55
  %vm58 = vcmp.eq.f32.partialorder %v52, 0.0
  %v59 = vand.u32 %v52, 2147483648
  %v60 = vsel %vm58, %v59, %v57
  %v61 = vrcp.pop %v60
  %v62 = vmul.f32 1.0, %v61
  %v63 = vsel %vm53, %v62, 0.0
  %v64 = vmul.f32 %v41, %v63
  %v65 = vmul.f32 %v42, %v63
  %66 = vxpose.xlu0.b32.start [1/16] %v64, 128
  %67 = vxpose.xlu0.b32.cont [2/16] %v65, 128
  %68 = vxpose.xlu0.b32.cont [3/16] 0.0, 128
  %69 = vxpose.xlu0.b32.cont [4/16] 0.0, 128
  %70 = vxpose.xlu0.b32.cont [5/16] 0.0, 128
  %71 = vxpose.xlu0.b32.cont [6/16] 0.0, 128
  %72 = vxpose.xlu0.b32.cont [7/16] 0.0, 128
  %73 = vxpose.xlu0.b32.cont [8/16] 0.0, 128
  %74 = vxpose.xlu0.b32.cont [9/16] 0.0, 128
  %75 = vxpose.xlu0.b32.cont [10/16] 0.0, 128
  %76 = vxpose.xlu0.b32.cont [11/16] 0.0, 128
  %77 = vxpose.xlu0.b32.cont [12/16] 0.0, 128
  %78 = vxpose.xlu0.b32.cont [13/16] 0.0, 128
  %79 = vxpose.xlu0.b32.cont [14/16] 0.0, 128
  %80 = vxpose.xlu0.b32.cont [15/16] 0.0, 128
  %81 = vxpose.xlu0.b32.end [16/16] 0.0, 128
  %v82 = vpop.trf.xlu0
  %v83 = vpop.trf.xlu0
  %v84 = vpop.trf.xlu0
  %v85 = vpop.trf.xlu0
  %v86 = vpop.trf.xlu0
  %v87 = vpop.trf.xlu0
  %v88 = vpop.trf.xlu0
  %v89 = vpop.trf.xlu0
  %v90 = vpop.trf.xlu0
  %v91 = vpop.trf.xlu0
  %v92 = vpop.trf.xlu0
  %v93 = vpop.trf.xlu0
  %v94 = vpop.trf.xlu0
  %v95 = vpop.trf.xlu0
  %v96 = vpop.trf.xlu0
  %v97 = vpop.trf.xlu0
  %v98 = vmul.f32 %v82, %v63
  %v99 = vmul.f32 %v83, %v63
  %vm100 = vcmask 64512
  %v102 = vsel %vm100, %v25, 0
  %v105 = vsel %vm100, %v26, 0
  %107 = vmatprep.subr.mxu0 0.0
  %108 = vmatpush1.msra.mxu0 %v27
  %109 = vmatprep.subr.mxu0 0.0
  %110 = vmatpush1.msra.mxu0 0.0
  %111 = vmatprep.subr.mxu0 0.0
  %112 = vmatpush1.msra.mxu0 0.0
  %113 = vmatprep.subr.mxu0 0.0
  %114 = vmatpush1.msra.mxu0 0.0
  %115 = vmatprep.subr.mxu0 0.0
  %116 = vmatpush1.msra.mxu0 0.0
  %117 = vmatprep.subr.mxu0 0.0
  %118 = vmatpush1.msra.mxu0 0.0
  %119 = vmatprep.subr.mxu0 0.0
  %120 = vmatpush1.msra.mxu0 0.0
  %121 = vmatprep.subr.mxu0 0.0
  %122 = vmatpush1.msra.mxu0 0.0
  %123 = vmatprep.subr.mxu0 0.0
  %124 = vmatpush1.msra.mxu0 0.0
  %125 = vmatprep.subr.mxu0 0.0
  %126 = vmatpush1.msra.mxu0 0.0
  %127 = vmatprep.subr.mxu0 0.0
  %128 = vmatpush1.msra.mxu0 0.0
  %129 = vmatprep.subr.mxu0 0.0
  %130 = vmatpush1.msra.mxu0 0.0
  %131 = vmatprep.subr.mxu0 0.0
  %132 = vmatpush1.msra.mxu0 0.0
  %133 = vmatprep.subr.mxu0 0.0
  %134 = vmatpush1.msra.mxu0 0.0
  %135 = vmatprep.subr.mxu0 0.0
  %136 = vmatpush1.msra.mxu0 0.0
  %137 = vmatprep.subr.mxu0 0.0
  %138 = vmatpush1.msra.mxu0 0.0
  %139 = vmatprep.subr.mxu0 0.0
  %140 = vmatpush1.msra.mxu0 0.0
  %141 = vmatprep.subr.mxu0 0.0
  %142 = vmatpush1.msra.mxu0 0.0
  %143 = vmatprep.subr.mxu0 0.0
  %144 = vmatpush1.msra.mxu0 0.0
  %145 = vmatprep.subr.mxu0 0.0
  %146 = vmatpush1.msra.mxu0 0.0
  %147 = vmatprep.subr.mxu0 0.0
  %148 = vmatpush1.msra.mxu0 0.0
  %149 = vmatprep.subr.mxu0 0.0
  %150 = vmatpush1.msra.mxu0 0.0
  %151 = vmatprep.subr.mxu0 0.0
  %152 = vmatpush1.msra.mxu0 0.0
  %153 = vmatprep.subr.mxu0 0.0
  %154 = vmatpush1.msra.mxu0 0.0
  %155 = vmatprep.subr.mxu0 0.0
  %156 = vmatpush1.msra.mxu0 0.0
  %157 = vmatprep.subr.mxu0 0.0
  %158 = vmatpush1.msra.mxu0 0.0
  %159 = vmatprep.subr.mxu0 0.0
  %160 = vmatpush1.msra.mxu0 0.0
  %161 = vmatprep.subr.mxu0 0.0
  %162 = vmatpush1.msra.mxu0 0.0
  %163 = vmatprep.subr.mxu0 0.0
  %164 = vmatpush1.msra.mxu0 0.0
  %165 = vmatprep.subr.mxu0 0.0
  %166 = vmatpush1.msra.mxu0 0.0
  %167 = vmatprep.subr.mxu0 0.0
  %168 = vmatpush1.msra.mxu0 0.0
  %169 = vmatprep.subr.mxu0 0.0
  %170 = vmatpush1.msra.mxu0 0.0
  %171 = vmatprep.mubr.f32.mxu0 0.0
  %172 = vmatmul.mubr.f32.gmra.mrb[0].mxu0 %v102
  %v173 = vpop.f32.mrb[0].mxu0
  %v174 = vadd.f32 0.0, %v173
  %v175 = vpop.f32.mrb[0].mxu0
  %176 = vmatprep.mubr.f32.mxu0 0.0
  %177 = vmatmul.mubr.f32.gmra.mrb[0].mxu0 %v105
  %v178 = vpop.f32.mrb[0].mxu0
  %v179 = vadd.f32 0.0, %v178
  %v180 = vpop.f32.mrb[0].mxu0
  %181 = vdwg.mxu0
  %v183 = vlaneseq
  %v184 = vshrl.u32 %v183, 7
  %v185 = vsub.s32 0, %v184
  %v186 = vrot.slane %v28, %v185
  %v189 = vsel %vm43, %v98, 0
  %v192 = vsel %vm43, %v99, 0
  %194 = vmatprep.subr.mxu0 0.0
  %195 = vmatpush1.msra.mxu0 %v174
  %196 = vmatprep.subr.mxu0 0.0
  %197 = vmatpush1.msra.mxu0 %v179
  %198 = vmatprep.subr.mxu0 0.0
  %199 = vmatpush1.msra.mxu0 0.0
  %200 = vmatprep.subr.mxu0 0.0
  %201 = vmatpush1.msra.mxu0 0.0
  %202 = vmatprep.subr.mxu0 0.0
  %203 = vmatpush1.msra.mxu0 0.0
  %204 = vmatprep.subr.mxu0 0.0
  %205 = vmatpush1.msra.mxu0 0.0
  %206 = vmatprep.subr.mxu0 0.0
  %207 = vmatpush1.msra.mxu0 0.0
  %208 = vmatprep.subr.mxu0 0.0
  %209 = vmatpush1.msra.mxu0 0.0
  %210 = vmatprep.subr.mxu0 0.0
  %211 = vmatpush1.msra.mxu0 0.0
  %212 = vmatprep.subr.mxu0 0.0
  %213 = vmatpush1.msra.mxu0 0.0
  %214 = vmatprep.subr.mxu0 0.0
  %215 = vmatpush1.msra.mxu0 0.0
  %216 = vmatprep.subr.mxu0 0.0
  %217 = vmatpush1.msra.mxu0 0.0
  %218 = vmatprep.subr.mxu0 0.0
  %219 = vmatpush1.msra.mxu0 0.0
  %220 = vmatprep.subr.mxu0 0.0
  %221 = vmatpush1.msra.mxu0 0.0
  %222 = vmatprep.subr.mxu0 0.0
  %223 = vmatpush1.msra.mxu0 0.0
  %224 = vmatprep.subr.mxu0 0.0
  %225 = vmatpush1.msra.mxu0 0.0
  %226 = vmatprep.subr.mxu0 0.0
  %227 = vmatpush1.msra.mxu0 0.0
  %228 = vmatprep.subr.mxu0 0.0
  %229 = vmatpush1.msra.mxu0 0.0
  %230 = vmatprep.subr.mxu0 0.0
  %231 = vmatpush1.msra.mxu0 0.0
  %232 = vmatprep.subr.mxu0 0.0
  %233 = vmatpush1.msra.mxu0 0.0
  %234 = vmatprep.subr.mxu0 0.0
  %235 = vmatpush1.msra.mxu0 0.0
  %236 = vmatprep.subr.mxu0 0.0
  %237 = vmatpush1.msra.mxu0 0.0
  %238 = vmatprep.subr.mxu0 0.0
  %239 = vmatpush1.msra.mxu0 0.0
  %240 = vmatprep.subr.mxu0 0.0
  %241 = vmatpush1.msra.mxu0 0.0
  %242 = vmatprep.subr.mxu0 0.0
  %243 = vmatpush1.msra.mxu0 0.0
  %244 = vmatprep.subr.mxu0 0.0
  %245 = vmatpush1.msra.mxu0 0.0
  %246 = vmatprep.subr.mxu0 0.0
  %247 = vmatpush1.msra.mxu0 0.0
  %248 = vmatprep.subr.mxu0 0.0
  %249 = vmatpush1.msra.mxu0 0.0
  %250 = vmatprep.subr.mxu0 0.0
  %251 = vmatpush1.msra.mxu0 0.0
  %252 = vmatprep.subr.mxu0 0.0
  %253 = vmatpush1.msra.mxu0 0.0
  %254 = vmatprep.subr.mxu0 0.0
  %255 = vmatpush1.msra.mxu0 0.0
  %256 = vmatprep.subr.mxu0 0.0
  %257 = vmatpush1.msra.mxu0 0.0
  %258 = vmatprep.mubr.f32.mxu0 0.0
  %259 = vmatmul.mubr.f32.gmra.mrb[0].mxu0 %v189
  %v260 = vpop.f32.mrb[0].mxu0
  %v261 = vadd.f32 %v186, %v260
  %v262 = vpop.f32.mrb[0].mxu0
  %263 = vmatprep.mubr.f32.mxu0 0.0
  %264 = vmatmul.mubr.f32.gmra.mrb[0].mxu0 %v192
  %v265 = vpop.f32.mrb[0].mxu0
  %v266 = vadd.f32 %v186, %v265
  %v267 = vpop.f32.mrb[0].mxu0
  %268 = vdwg.mxu0
  %v269 = vmax.f32 %v261, 0.0
  %v270 = vmax.f32 %v266, 0.0
  %v272 = vsel %vm43, %v269, 0
  %v275 = vsel %vm43, %v270, 0
  %277 = vmatprep.subr.mxu0 0.0
  %278 = vmatpush1.msra.mxu0 %v29
  %279 = vmatprep.subr.mxu0 0.0
  %280 = vmatpush1.msra.mxu0 %v30
  %281 = vmatprep.subr.mxu0 0.0
  %282 = vmatpush1.msra.mxu0 0.0
  %283 = vmatprep.subr.mxu0 0.0
  %284 = vmatpush1.msra.mxu0 0.0
  %285 = vmatprep.subr.mxu0 0.0
  %286 = vmatpush1.msra.mxu0 0.0
  %287 = vmatprep.subr.mxu0 0.0
  %288 = vmatpush1.msra.mxu0 0.0
  %289 = vmatprep.subr.mxu0 0.0
  %290 = vmatpush1.msra.mxu0 0.0
  %291 = vmatprep.subr.mxu0 0.0
  %292 = vmatpush1.msra.mxu0 0.0
  %293 = vmatprep.subr.mxu0 0.0
  %294 = vmatpush1.msra.mxu0 0.0
  %295 = vmatprep.subr.mxu0 0.0
  %296 = vmatpush1.msra.mxu0 0.0
  %297 = vmatprep.subr.mxu0 0.0
  %298 = vmatpush1.msra.mxu0 0.0
  %299 = vmatprep.subr.mxu0 0.0
  %300 = vmatpush1.msra.mxu0 0.0
  %301 = vmatprep.subr.mxu0 0.0
  %302 = vmatpush1.msra.mxu0 0.0
  %303 = vmatprep.subr.mxu0 0.0
  %304 = vmatpush1.msra.mxu0 0.0
  %305 = vmatprep.subr.mxu0 0.0
  %306 = vmatpush1.msra.mxu0 0.0
  %307 = vmatprep.subr.mxu0 0.0
  %308 = vmatpush1.msra.mxu0 0.0
  %309 = vmatprep.subr.mxu0 0.0
  %310 = vmatpush1.msra.mxu0 0.0
  %311 = vmatprep.subr.mxu0 0.0
  %312 = vmatpush1.msra.mxu0 0.0
  %313 = vmatprep.subr.mxu0 0.0
  %314 = vmatpush1.msra.mxu0 0.0
  %315 = vmatprep.subr.mxu0 0.0
  %316 = vmatpush1.msra.mxu0 0.0
  %317 = vmatprep.subr.mxu0 0.0
  %318 = vmatpush1.msra.mxu0 0.0
  %319 = vmatprep.subr.mxu0 0.0
  %320 = vmatpush1.msra.mxu0 0.0
  %321 = vmatprep.subr.mxu0 0.0
  %322 = vmatpush1.msra.mxu0 0.0
  %323 = vmatprep.subr.mxu0 0.0
  %324 = vmatpush1.msra.mxu0 0.0
  %325 = vmatprep.subr.mxu0 0.0
  %326 = vmatpush1.msra.mxu0 0.0
  %327 = vmatprep.subr.mxu0 0.0
  %328 = vmatpush1.msra.mxu0 0.0
  %329 = vmatprep.subr.mxu0 0.0
  %330 = vmatpush1.msra.mxu0 0.0
  %331 = vmatprep.subr.mxu0 0.0
  %332 = vmatpush1.msra.mxu0 0.0
  %333 = vmatprep.subr.mxu0 0.0
  %334 = vmatpush1.msra.mxu0 0.0
  %335 = vmatprep.subr.mxu0 0.0
  %336 = vmatpush1.msra.mxu0 0.0
  %337 = vmatprep.subr.mxu0 0.0
  %338 = vmatpush1.msra.mxu0 0.0
  %339 = vmatprep.subr.mxu0 0.0
  %340 = vmatpush1.msra.mxu0 0.0
  %341 = vmatprep.mubr.f32.mxu0 0.0
  %342 = vmatmul.mubr.f32.gmra.mrb[0].mxu0 %v272
  %v343 = vpop.f32.mrb[0].mxu0
  %v344 = vadd.f32 0.0, %v343
  %v345 = vpop.f32.mrb[0].mxu0
  %346 = vmatprep.mubr.f32.mxu0 0.0
  %347 = vmatmul.mubr.f32.gmra.mrb[0].mxu0 %v275
  %v348 = vpop.f32.mrb[0].mxu0
  %v349 = vadd.f32 0.0, %v348
  %v350 = vpop.f32.mrb[0].mxu0
  %351 = vdwg.mxu0
  %v353 = vlaneseq
  %v354 = vshrl.u32 %v353, 7
  %v355 = vsub.s32 0, %v354
  %v356 = vrot.slane %v31, %v355
  %358 = vmatprep.subr.mxu0 0.0
  %359 = vmatpush1.msra.mxu0 %v344
  %360 = vmatprep.subr.mxu0 0.0
  %361 = vmatpush1.msra.mxu0 %v349
  %362 = vmatprep.subr.mxu0 0.0
  %363 = vmatpush1.msra.mxu0 0.0
  %364 = vmatprep.subr.mxu0 0.0
  %365 = vmatpush1.msra.mxu0 0.0
  %366 = vmatprep.subr.mxu0 0.0
  %367 = vmatpush1.msra.mxu0 0.0
  %368 = vmatprep.subr.mxu0 0.0
  %369 = vmatpush1.msra.mxu0 0.0
  %370 = vmatprep.subr.mxu0 0.0
  %371 = vmatpush1.msra.mxu0 0.0
  %372 = vmatprep.subr.mxu0 0.0
  %373 = vmatpush1.msra.mxu0 0.0
  %374 = vmatprep.subr.mxu0 0.0
  %375 = vmatpush1.msra.mxu0 0.0
  %376 = vmatprep.subr.mxu0 0.0
  %377 = vmatpush1.msra.mxu0 0.0
  %378 = vmatprep.subr.mxu0 0.0
  %379 = vmatpush1.msra.mxu0 0.0
  %380 = vmatprep.subr.mxu0 0.0
  %381 = vmatpush1.msra.mxu0 0.0
  %382 = vmatprep.subr.mxu0 0.0
  %383 = vmatpush1.msra.mxu0 0.0
  %384 = vmatprep.subr.mxu0 0.0
  %385 = vmatpush1.msra.mxu0 0.0
  %386 = vmatprep.subr.mxu0 0.0
  %387 = vmatpush1.msra.mxu0 0.0
  %388 = vmatprep.subr.mxu0 0.0
  %389 = vmatpush1.msra.mxu0 0.0
  %390 = vmatprep.subr.mxu0 0.0
  %391 = vmatpush1.msra.mxu0 0.0
  %392 = vmatprep.subr.mxu0 0.0
  %393 = vmatpush1.msra.mxu0 0.0
  %394 = vmatprep.subr.mxu0 0.0
  %395 = vmatpush1.msra.mxu0 0.0
  %396 = vmatprep.subr.mxu0 0.0
  %397 = vmatpush1.msra.mxu0 0.0
  %398 = vmatprep.subr.mxu0 0.0
  %399 = vmatpush1.msra.mxu0 0.0
  %400 = vmatprep.subr.mxu0 0.0
  %401 = vmatpush1.msra.mxu0 0.0
  %402 = vmatprep.subr.mxu0 0.0
  %403 = vmatpush1.msra.mxu0 0.0
  %404 = vmatprep.subr.mxu0 0.0
  %405 = vmatpush1.msra.mxu0 0.0
  %406 = vmatprep.subr.mxu0 0.0
  %407 = vmatpush1.msra.mxu0 0.0
  %408 = vmatprep.subr.mxu0 0.0
  %409 = vmatpush1.msra.mxu0 0.0
  %410 = vmatprep.subr.mxu0 0.0
  %411 = vmatpush1.msra.mxu0 0.0
  %412 = vmatprep.subr.mxu0 0.0
  %413 = vmatpush1.msra.mxu0 0.0
  %414 = vmatprep.subr.mxu0 0.0
  %415 = vmatpush1.msra.mxu0 0.0
  %416 = vmatprep.subr.mxu0 0.0
  %417 = vmatpush1.msra.mxu0 0.0
  %418 = vmatprep.subr.mxu0 0.0
  %419 = vmatpush1.msra.mxu0 0.0
  %420 = vmatprep.subr.mxu0 0.0
  %421 = vmatpush1.msra.mxu0 0.0
  %422 = vmatprep.mubr.f32.mxu0 0.0
  %423 = vmatmul.mubr.f32.gmra.mrb[0].mxu0 %v189
  %v424 = vpop.f32.mrb[0].mxu0
  %v425 = vadd.f32 %v356, %v424
  %v426 = vpop.f32.mrb[0].mxu0
  %427 = vmatprep.mubr.f32.mxu0 0.0
  %428 = vmatmul.mubr.f32.gmra.mrb[0].mxu0 %v192
  %v429 = vpop.f32.mrb[0].mxu0
  %v430 = vadd.f32 %v356, %v429
  %v431 = vpop.f32.mrb[0].mxu0
  %432 = vdwg.mxu0
  %433 = vst.msk [vmem:[%s6] sm:$0xff] %vm100, %v425
  %434 = vst.msk [vmem:[%s6 + $0x8] sm:$0xff] %vm100, %v430
  // Predicated region
  $region26: #{bargrain_forward.4} parent=0 // pred_check
    _
  $region27: #{bargrain_forward.4} parent=0 // pred_check_branch
    %436 = sbr.rel (0) target = $region29
  $region28: #{bargrain_forward.4} parent=0 // pred_region
    _
  $region29: #{bargrain_forward.4} parent=0 // pred_fallthru
    _
  // Predicated region
  $region30: #{bargrain_forward.4} parent=0 // pred_check
    _
  $region31: #{bargrain_forward.4} parent=0 // pred_check_branch
    %438 = sbr.rel (0) target = $region33
  $region32: #{bargrain_forward.4} parent=0 // pred_region
    _
  $region33: #{bargrain_forward.4} parent=0 // pred_fallthru
    _

// kernel: bargrain_forward.5
$region0: #{bargrain_forward.5}
  #allocation0 [shape = 'u32[]', space=smem, size = 0x4, offset = 0x4, fixed_abs, tag = 'smem constant byte address 0x4 - core index']
  #allocation1 [shape = 'u32[144,128]{1,0:T(1,128)}', space=vmem, size = 0x12000, scoped, tag = 'internal scratch']
  %s0 = inlined_call_operand.vmem [shape: f32[2,64], index: 0, kind: input, shape index: {}]
  %s1 = inlined_call_operand.vmem [shape: f32[2,64], index: 1, kind: input, shape index: {}]
  %s2 = inlined_call_operand.vmem [shape: f32[64,256], index: 2, kind: input, shape index: {}]
  %s3 = inlined_call_operand.vmem [shape: f32[64,256], index: 3, kind: input, shape index: {}]
  %s4 = inlined_call_operand.vmem [shape: f32[1,256], index: 4, kind: input, shape index: {}]
  %s5 = inlined_call_operand.vmem [shape: f32[256,32], index: 5, kind: input, shape index: {}]
  %s6 = inlined_call_operand.vmem [shape: f32[1,32], index: 6, kind: input, shape index: {}]
  %s7 = inlined_call_operand.vmem [shape: f32[32,2], index: 7, kind: input, shape index: {}]
  %s8 = inlined_call_operand.vmem [shape: f32[1,2], index: 8, kind: input, shape index: {}]
  %s9 = inlined_call_operand.hbm [shape: f32[2,2], index: 9, kind: output, shape index: {}]
  %s10 = sld [smem:[#allocation0]]
  $region46: #{bargrain_forward.5} parent=0
    _
  %s12 = ssub.s32 1, %s10
  %s13 = scalar_select 0, %s12, %s10
  $region1: #{bargrain_forward.5} parent=0
    #allocation2 [shape = 'u8[1024]{0}', space=vmem, size = 0x400, scoped, tag = 'output window, operand 0, single buffered']
    #allocation3 [shape = 's32[1]{0}', space=sflag, size = 0x4, scoped, tag = 'scoped memory for bargrain_forward.5']
    %14 = vsyncpa [#allocation3], 0
    // Predicated region
    $region2: #{bargrain_forward.5} parent=1 // pred_check
      _
    $region3: #{bargrain_forward.5} parent=1 // pred_check_branch
      %16 = sbr.rel (0) target = $region5
    $region4: #{bargrain_forward.5} parent=1 // pred_region
      _
    $region5: #{bargrain_forward.5} parent=1 // pred_fallthru
      _
    // Predicated region
    $region6: #{bargrain_forward.5} parent=1 // pred_check
      _
    $region7: #{bargrain_forward.5} parent=1 // pred_check_branch
      %18 = sbr.rel (0) target = $region9
    $region8: #{bargrain_forward.5} parent=1 // pred_region
      _
    $region9: #{bargrain_forward.5} parent=1 // pred_fallthru
      _
    // Predicated region
    $region10: #{bargrain_forward.5} parent=1 // pred_check
      _
    $region11: #{bargrain_forward.5} parent=1 // pred_check_branch
      %20 = sbr.rel (0) target = $region13
    $region12: #{bargrain_forward.5} parent=1 // pred_region
      _
    $region13: #{bargrain_forward.5} parent=1 // pred_fallthru
      _
    // Predicated region
    $region14: #{bargrain_forward.5} parent=1 // pred_check
      _
    $region15: #{bargrain_forward.5} parent=1 // pred_check_branch
      %22 = sbr.rel (0) target = $region17
    $region16: #{bargrain_forward.5} parent=1 // pred_region
      _
    $region17: #{bargrain_forward.5} parent=1 // pred_fallthru
      _
    // Predicated region
    $region18: #{bargrain_forward.5} parent=1 // pred_check
      _
    $region19: #{bargrain_forward.5} parent=1 // pred_check_branch
      %24 = sbr.rel (0) target = $region21
    $region20: #{bargrain_forward.5} parent=1 // pred_region
      _
    $region21: #{bargrain_forward.5} parent=1 // pred_fallthru
      _
    // Predicated region
    $region22: #{bargrain_forward.5} parent=1 // pred_check
      _
    $region23: #{bargrain_forward.5} parent=1 // pred_check_branch
      %26 = sbr.rel (0) target = $region25
    $region24: #{bargrain_forward.5} parent=1 // pred_region
      _
    $region25: #{bargrain_forward.5} parent=1 // pred_fallthru
      _
    // Predicated region
    $region26: #{bargrain_forward.5} parent=1 // pred_check
      _
    $region27: #{bargrain_forward.5} parent=1 // pred_check_branch
      %28 = sbr.rel (0) target = $region29
    $region28: #{bargrain_forward.5} parent=1 // pred_region
      _
    $region29: #{bargrain_forward.5} parent=1 // pred_fallthru
      _
    // Predicated region
    $region30: #{bargrain_forward.5} parent=1 // pred_check
      _
    $region31: #{bargrain_forward.5} parent=1 // pred_check_branch
      %30 = sbr.rel (0) target = $region33
    $region32: #{bargrain_forward.5} parent=1 // pred_region
      _
    $region33: #{bargrain_forward.5} parent=1 // pred_fallthru
      _
    // Predicated region
    $region34: #{bargrain_forward.5} parent=1 // pred_check
      _
    $region35: #{bargrain_forward.5} parent=1 // pred_check_branch
      %32 = sbr.rel (0) target = $region37
    $region36: #{bargrain_forward.5} parent=1 // pred_region
      _
    $region37: #{bargrain_forward.5} parent=1 // pred_fallthru
      _
    %v33 = vld [vmem:[%s0] sm:$0x3]
    %v34 = vld [vmem:[%s2] sm:$0xff]
    %v35 = vld [vmem:[%s2 + $0x8] sm:$0xff]
    %v36 = vld [vmem:[%s2 + $0x10] sm:$0xff]
    %v37 = vld [vmem:[%s2 + $0x18] sm:$0xff]
    %v38 = vld [vmem:[%s2 + $0x20] sm:$0xff]
    %v39 = vld [vmem:[%s2 + $0x28] sm:$0xff]
    %v40 = vld [vmem:[%s2 + $0x30] sm:$0xff]
    %v41 = vld [vmem:[%s2 + $0x38] sm:$0xff]
    %v42 = vld [vmem:[%s2 + $0x40] sm:$0xff]
    %v43 = vld [vmem:[%s2 + $0x48] sm:$0xff]
    %v44 = vld [vmem:[%s2 + $0x50] sm:$0xff]
    %v45 = vld [vmem:[%s2 + $0x58] sm:$0xff]
    %v46 = vld [vmem:[%s2 + $0x60] sm:$0xff]
    %v47 = vld [vmem:[%s2 + $0x68] sm:$0xff]
    %v48 = vld [vmem:[%s2 + $0x70] sm:$0xff]
    %v49 = vld [vmem:[%s2 + $0x78] sm:$0xff]
    %v50 = vld [vmem:[%s1] sm:$0x3]
    %v51 = vld [vmem:[%s3] sm:$0xff]
    %v52 = vld [vmem:[%s3 + $0x8] sm:$0xff]
    %v53 = vld [vmem:[%s3 + $0x10] sm:$0xff]
    %v54 = vld [vmem:[%s3 + $0x18] sm:$0xff]
    %v55 = vld [vmem:[%s3 + $0x20] sm:$0xff]
    %v56 = vld [vmem:[%s3 + $0x28] sm:$0xff]
    %v57 = vld [vmem:[%s3 + $0x30] sm:$0xff]
    %v58 = vld [vmem:[%s3 + $0x38] sm:$0xff]
    %v59 = vld [vmem:[%s3 + $0x40] sm:$0xff]
    %v60 = vld [vmem:[%s3 + $0x48] sm:$0xff]
    %v61 = vld [vmem:[%s3 + $0x50] sm:$0xff]
    %v62 = vld [vmem:[%s3 + $0x58] sm:$0xff]
    %v63 = vld [vmem:[%s3 + $0x60] sm:$0xff]
    %v64 = vld [vmem:[%s3 + $0x68] sm:$0xff]
    %v65 = vld [vmem:[%s3 + $0x70] sm:$0xff]
    %v66 = vld [vmem:[%s3 + $0x78] sm:$0xff]
    %vm67 = vcmask 523264
    %v69 = vsel %vm67, %v50, 0
    %71 = vmatprep.subr.mxu0 %v52
    %72 = vmatpush1.msra.mxu0 %v51
    %73 = vmatprep.subr.mxu0 %v54
    %74 = vmatpush1.msra.mxu0 %v53
    %75 = vmatprep.subr.mxu0 %v56
    %76 = vmatpush1.msra.mxu0 %v55
    %77 = vmatprep.subr.mxu0 %v58
    %78 = vmatpush1.msra.mxu0 %v57
    %79 = vmatprep.subr.mxu0 %v60
    %80 = vmatpush1.msra.mxu0 %v59
    %81 = vmatprep.subr.mxu0 %v62
    %82 = vmatpush1.msra.mxu0 %v61
    %83 = vmatprep.subr.mxu0 %v64
    %84 = vmatpush1.msra.mxu0 %v63
    %85 = vmatprep.subr.mxu0 %v66
    %86 = vmatpush1.msra.mxu0 %v65
    %87 = vmatprep.subr.mxu0 0.0
    %88 = vmatpush1.msra.mxu0 0.0
    %89 = vmatprep.subr.mxu0 0.0
    %90 = vmatpush1.msra.mxu0 0.0
    %91 = vmatprep.subr.mxu0 0.0
    %92 = vmatpush1.msra.mxu0 0.0
    %93 = vmatprep.subr.mxu0 0.0
    %94 = vmatpush1.msra.mxu0 0.0
    %95 = vmatprep.subr.mxu0 0.0
    %96 = vmatpush1.msra.mxu0 0.0
    %97 = vmatprep.subr.mxu0 0.0
    %98 = vmatpush1.msra.mxu0 0.0
    %99 = vmatprep.subr.mxu0 0.0
    %100 = vmatpush1.msra.mxu0 0.0
    %101 = vmatprep.subr.mxu0 0.0
    %102 = vmatpush1.msra.mxu0 0.0
    %103 = vmatprep.subr.mxu0 0.0
    %104 = vmatpush1.msra.mxu0 0.0
    %105 = vmatprep.subr.mxu0 0.0
    %106 = vmatpush1.msra.mxu0 0.0
    %107 = vmatprep.subr.mxu0 0.0
    %108 = vmatpush1.msra.mxu0 0.0
    %109 = vmatprep.subr.mxu0 0.0
    %110 = vmatpush1.msra.mxu0 0.0
    %111 = vmatprep.subr.mxu0 0.0
    %112 = vmatpush1.msra.mxu0 0.0
    %113 = vmatprep.subr.mxu0 0.0
    %114 = vmatpush1.msra.mxu0 0.0
    %115 = vmatprep.subr.mxu0 0.0
    %116 = vmatpush1.msra.mxu0 0.0
    %117 = vmatprep.subr.mxu0 0.0
    %118 = vmatpush1.msra.mxu0 0.0
    %119 = vmatprep.subr.mxu0 0.0
    %120 = vmatpush1.msra.mxu0 0.0
    %121 = vmatprep.subr.mxu0 0.0
    %122 = vmatpush1.msra.mxu0 0.0
    %123 = vmatprep.subr.mxu0 0.0
    %124 = vmatpush1.msra.mxu0 0.0
    %125 = vmatprep.subr.mxu0 0.0
    %126 = vmatpush1.msra.mxu0 0.0
    %127 = vmatprep.subr.mxu0 0.0
    %128 = vmatpush1.msra.mxu0 0.0
    %129 = vmatprep.subr.mxu0 0.0
    %130 = vmatpush1.msra.mxu0 0.0
    %131 = vmatprep.subr.mxu0 0.0
    %132 = vmatpush1.msra.mxu0 0.0
    %133 = vmatprep.subr.mxu0 0.0
    %134 = vmatpush1.msra.mxu0 0.0
    %135 = vmatprep.mubr.f32.mxu0 0.0
    %136 = vmatmul.mubr.f32.gmra.mrb[0].mxu0 %v69
    %v137 = vpop.f32.mrb[0].mxu0
    %v138 = vadd.f32 0.0, %v137
    %v139 = vpop.f32.mrb[0].mxu0
    %v140 = vadd.f32 0.0, %v139
    %141 = vdwg.mxu0
    %v143 = vsel %vm67, %v33, 0
    %145 = vmatprep.subr.mxu0 %v35
    %146 = vmatpush1.msra.mxu0 %v34
    %147 = vmatprep.subr.mxu0 %v37
    %148 = vmatpush1.msra.mxu0 %v36
    %149 = vmatprep.subr.mxu0 %v39
    %150 = vmatpush1.msra.mxu0 %v38
    %151 = vmatprep.subr.mxu0 %v41
    %152 = vmatpush1.msra.mxu0 %v40
    %153 = vmatprep.subr.mxu0 %v43
    %154 = vmatpush1.msra.mxu0 %v42
    %155 = vmatprep.subr.mxu0 %v45
    %156 = vmatpush1.msra.mxu0 %v44
    %157 = vmatprep.subr.mxu0 %v47
    %158 = vmatpush1.msra.mxu0 %v46
    %159 = vmatprep.subr.mxu0 %v49
    %160 = vmatpush1.msra.mxu0 %v48
    %161 = vmatprep.subr.mxu0 0.0
    %162 = vmatpush1.msra.mxu0 0.0
    %163 = vmatprep.subr.mxu0 0.0
    %164 = vmatpush1.msra.mxu0 0.0
    %165 = vmatprep.subr.mxu0 0.0
    %166 = vmatpush1.msra.mxu0 0.0
    %167 = vmatprep.subr.mxu0 0.0
    %168 = vmatpush1.msra.mxu0 0.0
    %169 = vmatprep.subr.mxu0 0.0
    %170 = vmatpush1.msra.mxu0 0.0
    %171 = vmatprep.subr.mxu0 0.0
    %172 = vmatpush1.msra.mxu0 0.0
    %173 = vmatprep.subr.mxu0 0.0
    %174 = vmatpush1.msra.mxu0 0.0
    %175 = vmatprep.subr.mxu0 0.0
    %176 = vmatpush1.msra.mxu0 0.0
    %177 = vmatprep.subr.mxu0 0.0
    %178 = vmatpush1.msra.mxu0 0.0
    %179 = vmatprep.subr.mxu0 0.0
    %180 = vmatpush1.msra.mxu0 0.0
    %181 = vmatprep.subr.mxu0 0.0
    %182 = vmatpush1.msra.mxu0 0.0
    %183 = vmatprep.subr.mxu0 0.0
    %184 = vmatpush1.msra.mxu0 0.0
    %185 = vmatprep.subr.mxu0 0.0
    %186 = vmatpush1.msra.mxu0 0.0
    %187 = vmatprep.subr.mxu0 0.0
    %188 = vmatpush1.msra.mxu0 0.0
    %189 = vmatprep.subr.mxu0 0.0
    %190 = vmatpush1.msra.mxu0 0.0
    %191 = vmatprep.subr.mxu0 0.0
    %192 = vmatpush1.msra.mxu0 0.0
    %193 = vmatprep.subr.mxu0 0.0
    %194 = vmatpush1.msra.mxu0 0.0
    %195 = vmatprep.subr.mxu0 0.0
    %196 = vmatpush1.msra.mxu0 0.0
    %197 = vmatprep.subr.mxu0 0.0
    %198 = vmatpush1.msra.mxu0 0.0
    %199 = vmatprep.subr.mxu0 0.0
    %200 = vmatpush1.msra.mxu0 0.0
    %201 = vmatprep.subr.mxu0 0.0
    %202 = vmatpush1.msra.mxu0 0.0
    %203 = vmatprep.subr.mxu0 0.0
    %204 = vmatpush1.msra.mxu0 0.0
    %205 = vmatprep.subr.mxu0 0.0
    %206 = vmatpush1.msra.mxu0 0.0
    %207 = vmatprep.subr.mxu0 0.0
    %208 = vmatpush1.msra.mxu0 0.0
    %209 = vmatprep.mubr.f32.mxu0 0.0
    %210 = vmatmul.mubr.f32.gmra.mrb[0].mxu0 %v143
    %v211 = vpop.f32.mrb[0].mxu0
    %v212 = vadd.f32 %v138, %v211
    %v213 = vpop.f32.mrb[0].mxu0
    %v214 = vadd.f32 %v140, %v213
    %215 = vdwg.mxu0
    %v216 = vld [vmem:[%s4] sm:$0x3]
    %v218 = vlaneseq
    %v219 = vshrl.u32 %v218, 7
    %v220 = vsub.s32 0, %v219
    %v221 = vrot.slane %v216, %v220
    %v222 = vlaneseq
    %v223 = vshrl.u32 %v222, 7
    %v224 = vsub.s32 1, %v223
    %v225 = vrot.slane %v216, %v224
    %v228 = vadd.f32 %v212, %v221
    %v229 = vadd.f32 %v214, %v225
    %vm230 = vcmp.ge.f32.partialorder %v228, 0.0
    %vm231 = vcmp.ge.f32.partialorder %v229, 0.0
    %v232 = vmul.f32 %v228, 0.2
    %v233 = vmul.f32 %v229, 0.2
    %v234 = vsel %vm230, %v228, %v232
    %v235 = vsel %vm231, %v229, %v233
    %v236 = vld [vmem:[%s5] sm:$0xff]
    %v237 = vld [vmem:[%s5 + $0x8] sm:$0xff]
    %v238 = vld [vmem:[%s5 + $0x10] sm:$0xff]
    %v239 = vld [vmem:[%s5 + $0x18] sm:$0xff]
    %v240 = vld [vmem:[%s5 + $0x20] sm:$0xff]
    %v241 = vld [vmem:[%s5 + $0x28] sm:$0xff]
    %v242 = vld [vmem:[%s5 + $0x30] sm:$0xff]
    %v243 = vld [vmem:[%s5 + $0x38] sm:$0xff]
    %v244 = vld [vmem:[%s5 + $0x40] sm:$0xff]
    %v245 = vld [vmem:[%s5 + $0x48] sm:$0xff]
    %v246 = vld [vmem:[%s5 + $0x50] sm:$0xff]
    %v247 = vld [vmem:[%s5 + $0x58] sm:$0xff]
    %v248 = vld [vmem:[%s5 + $0x60] sm:$0xff]
    %v249 = vld [vmem:[%s5 + $0x68] sm:$0xff]
    %v250 = vld [vmem:[%s5 + $0x70] sm:$0xff]
    %v251 = vld [vmem:[%s5 + $0x78] sm:$0xff]
    %v252 = vld [vmem:[%s5 + $0x80] sm:$0xff]
    %v253 = vld [vmem:[%s5 + $0x88] sm:$0xff]
    %v254 = vld [vmem:[%s5 + $0x90] sm:$0xff]
    %v255 = vld [vmem:[%s5 + $0x98] sm:$0xff]
    %v256 = vld [vmem:[%s5 + $0xa0] sm:$0xff]
    %v257 = vld [vmem:[%s5 + $0xa8] sm:$0xff]
    %v258 = vld [vmem:[%s5 + $0xb0] sm:$0xff]
    %v259 = vld [vmem:[%s5 + $0xb8] sm:$0xff]
    %v260 = vld [vmem:[%s5 + $0xc0] sm:$0xff]
    %v261 = vld [vmem:[%s5 + $0xc8] sm:$0xff]
    %v262 = vld [vmem:[%s5 + $0xd0] sm:$0xff]
    %v263 = vld [vmem:[%s5 + $0xd8] sm:$0xff]
    %v264 = vld [vmem:[%s5 + $0xe0] sm:$0xff]
    %v265 = vld [vmem:[%s5 + $0xe8] sm:$0xff]
    %v266 = vld [vmem:[%s5 + $0xf0] sm:$0xff]
    %v267 = vld [vmem:[%s5 + $0xf8] sm:$0xff]
    %v268 = vld [vmem:[%s6] sm:$0x1]
    %v270 = vlaneseq
    %v271 = vshrl.u32 %v270, 7
    %v272 = vsub.s32 0, %v271
    %v273 = vrot.slane %v268, %v272
    %275 = vmatprep.subr.mxu0 0.0
    %276 = vmatpush1.msra.mxu0 %v236
    %277 = vmatprep.subr.mxu0 0.0
    %278 = vmatpush1.msra.mxu0 %v237
    %279 = vmatprep.subr.mxu0 0.0
    %280 = vmatpush1.msra.mxu0 %v238
    %281 = vmatprep.subr.mxu0 0.0
    %282 = vmatpush1.msra.mxu0 %v239
    %283 = vmatprep.subr.mxu0 0.0
    %284 = vmatpush1.msra.mxu0 %v240
    %285 = vmatprep.subr.mxu0 0.0
    %286 = vmatpush1.msra.mxu0 %v241
    %287 = vmatprep.subr.mxu0 0.0
    %288 = vmatpush1.msra.mxu0 %v242
    %289 = vmatprep.subr.mxu0 0.0
    %290 = vmatpush1.msra.mxu0 %v243
    %291 = vmatprep.subr.mxu0 0.0
    %292 = vmatpush1.msra.mxu0 %v244
    %293 = vmatprep.subr.mxu0 0.0
    %294 = vmatpush1.msra.mxu0 %v245
    %295 = vmatprep.subr.mxu0 0.0
    %296 = vmatpush1.msra.mxu0 %v246
    %297 = vmatprep.subr.mxu0 0.0
    %298 = vmatpush1.msra.mxu0 %v247
    %299 = vmatprep.subr.mxu0 0.0
    %300 = vmatpush1.msra.mxu0 %v248
    %301 = vmatprep.subr.mxu0 0.0
    %302 = vmatpush1.msra.mxu0 %v249
    %303 = vmatprep.subr.mxu0 0.0
    %304 = vmatpush1.msra.mxu0 %v250
    %305 = vmatprep.subr.mxu0 0.0
    %306 = vmatpush1.msra.mxu0 %v251
    %307 = vmatprep.subr.mxu0 0.0
    %308 = vmatpush1.msra.mxu0 %v252
    %309 = vmatprep.subr.mxu0 0.0
    %310 = vmatpush1.msra.mxu0 %v253
    %311 = vmatprep.subr.mxu0 0.0
    %312 = vmatpush1.msra.mxu0 %v254
    %313 = vmatprep.subr.mxu0 0.0
    %314 = vmatpush1.msra.mxu0 %v255
    %315 = vmatprep.subr.mxu0 0.0
    %316 = vmatpush1.msra.mxu0 %v256
    %317 = vmatprep.subr.mxu0 0.0
    %318 = vmatpush1.msra.mxu0 %v257
    %319 = vmatprep.subr.mxu0 0.0
    %320 = vmatpush1.msra.mxu0 %v258
    %321 = vmatprep.subr.mxu0 0.0
    %322 = vmatpush1.msra.mxu0 %v259
    %323 = vmatprep.subr.mxu0 0.0
    %324 = vmatpush1.msra.mxu0 %v260
    %325 = vmatprep.subr.mxu0 0.0
    %326 = vmatpush1.msra.mxu0 %v261
    %327 = vmatprep.subr.mxu0 0.0
    %328 = vmatpush1.msra.mxu0 %v262
    %329 = vmatprep.subr.mxu0 0.0
    %330 = vmatpush1.msra.mxu0 %v263
    %331 = vmatprep.subr.mxu0 0.0
    %332 = vmatpush1.msra.mxu0 %v264
    %333 = vmatprep.subr.mxu0 0.0
    %334 = vmatpush1.msra.mxu0 %v265
    %335 = vmatprep.subr.mxu0 0.0
    %336 = vmatpush1.msra.mxu0 %v266
    %337 = vmatprep.subr.mxu0 0.0
    %338 = vmatpush1.msra.mxu0 %v267
    %339 = vmatprep.mubr.f32.mxu0 %v235
    %340 = vmatmul.mubr.f32.gmra.mrb[0].mxu0 %v234
    %v341 = vpop.f32.mrb[0].mxu0
    %v342 = vadd.f32 %v273, %v341
    %v343 = vpop.f32.mrb[0].mxu0
    %344 = vdwg.mxu0
    %vm345 = vcmp.ge.f32.partialorder %v342, 0.0
    %v346 = vmul.f32 %v342, 0.2
    %v347 = vsel %vm345, %v342, %v346
    %v348 = vld [vmem:[%s7] sm:$0xff]
    %v349 = vld [vmem:[%s7 + $0x8] sm:$0xff]
    %v350 = vld [vmem:[%s7 + $0x10] sm:$0xff]
    %v351 = vld [vmem:[%s7 + $0x18] sm:$0xff]
    %v352 = vld [vmem:[%s8] sm:$0x1]
    %v354 = vlaneseq
    %v355 = vshrl.u32 %v354, 7
    %v356 = vsub.s32 0, %v355
    %v357 = vrot.slane %v352, %v356
    %vm359 = vcmask 261120
    %v361 = vsel %vm359, %v347, 0
    %363 = vmatprep.subr.mxu0 0.0
    %364 = vmatpush1.msra.mxu0 %v348
    %365 = vmatprep.subr.mxu0 0.0
    %366 = vmatpush1.msra.mxu0 %v349
    %367 = vmatprep.subr.mxu0 0.0
    %368 = vmatpush1.msra.mxu0 %v350
    %369 = vmatprep.subr.mxu0 0.0
    %370 = vmatpush1.msra.mxu0 %v351
    %371 = vmatprep.subr.mxu0 0.0
    %372 = vmatpush1.msra.mxu0 0.0
    %373 = vmatprep.subr.mxu0 0.0
    %374 = vmatpush1.msra.mxu0 0.0
    %375 = vmatprep.subr.mxu0 0.0
    %376 = vmatpush1.msra.mxu0 0.0
    %377 = vmatprep.subr.mxu0 0.0
    %378 = vmatpush1.msra.mxu0 0.0
    %379 = vmatprep.subr.mxu0 0.0
    %380 = vmatpush1.msra.mxu0 0.0
    %381 = vmatprep.subr.mxu0 0.0
    %382 = vmatpush1.msra.mxu0 0.0
    %383 = vmatprep.subr.mxu0 0.0
    %384 = vmatpush1.msra.mxu0 0.0
    %385 = vmatprep.subr.mxu0 0.0
    %386 = vmatpush1.msra.mxu0 0.0
    %387 = vmatprep.subr.mxu0 0.0
    %388 = vmatpush1.msra.mxu0 0.0
    %389 = vmatprep.subr.mxu0 0.0
    %390 = vmatpush1.msra.mxu0 0.0
    %391 = vmatprep.subr.mxu0 0.0
    %392 = vmatpush1.msra.mxu0 0.0
    %393 = vmatprep.subr.mxu0 0.0
    %394 = vmatpush1.msra.mxu0 0.0
    %395 = vmatprep.subr.mxu0 0.0
    %396 = vmatpush1.msra.mxu0 0.0
    %397 = vmatprep.subr.mxu0 0.0
    %398 = vmatpush1.msra.mxu0 0.0
    %399 = vmatprep.subr.mxu0 0.0
    %400 = vmatpush1.msra.mxu0 0.0
    %401 = vmatprep.subr.mxu0 0.0
    %402 = vmatpush1.msra.mxu0 0.0
    %403 = vmatprep.subr.mxu0 0.0
    %404 = vmatpush1.msra.mxu0 0.0
    %405 = vmatprep.subr.mxu0 0.0
    %406 = vmatpush1.msra.mxu0 0.0
    %407 = vmatprep.subr.mxu0 0.0
    %408 = vmatpush1.msra.mxu0 0.0
    %409 = vmatprep.subr.mxu0 0.0
    %410 = vmatpush1.msra.mxu0 0.0
    %411 = vmatprep.subr.mxu0 0.0
    %412 = vmatpush1.msra.mxu0 0.0
    %413 = vmatprep.subr.mxu0 0.0
    %414 = vmatpush1.msra.mxu0 0.0
    %415 = vmatprep.subr.mxu0 0.0
    %416 = vmatpush1.msra.mxu0 0.0
    %417 = vmatprep.subr.mxu0 0.0
    %418 = vmatpush1.msra.mxu0 0.0
    %419 = vmatprep.subr.mxu0 0.0
    %420 = vmatpush1.msra.mxu0 0.0
    %421 = vmatprep.subr.mxu0 0.0
    %422 = vmatpush1.msra.mxu0 0.0
    %423 = vmatprep.subr.mxu0 0.0
    %424 = vmatpush1.msra.mxu0 0.0
    %425 = vmatprep.subr.mxu0 0.0
    %426 = vmatpush1.msra.mxu0 0.0
    %427 = vmatprep.mubr.f32.mxu0 0.0
    %428 = vmatmul.mubr.f32.gmra.mrb[0].mxu0 %v361
    %v429 = vpop.f32.mrb[0].mxu0
    %v430 = vadd.f32 %v357, %v429
    %v431 = vpop.f32.mrb[0].mxu0
    %432 = vdwg.mxu0
    %vm433 = vcmask 9216
    %434 = vst.msk [vmem:[#allocation2] sm:$0x3] %vm433, %v430
    // Predicated region
    $region38: #{bargrain_forward.5} parent=1 // pred_check
      _
    $region39: #{bargrain_forward.5} parent=1 // pred_check_branch
      %436 = sbr.rel (0) target = $region41
    $region40: #{bargrain_forward.5} parent=1 // pred_region
      %s438 = ssub.s32 32, 32
      %439 = vsyncadd [#allocation3], %s438
      %s441 = sshll.u32 [#allocation2], 4
      %s442 = int_to_ptr.vmem [resolvable:$true] %s441
      %444 = dma.vmem_to_hbm [thread:$0]  %s442, 32, %s9, [#allocation3]
    $region41: #{bargrain_forward.5} parent=1 // pred_fallthru
      _
    // Predicated region
    $region42: #{bargrain_forward.5} parent=1 // pred_check
      _
    $region43: #{bargrain_forward.5} parent=1 // pred_check_branch
      %446 = sbr.rel (0) target = $region45
    $region44: #{bargrain_forward.5} parent=1 // pred_region
      %447 = dma.done [#allocation3], 32
    $region45: #{bargrain_forward.5} parent=1 // pred_fallthru
      _
    %448 = vsyncpa [#allocation3], 1

// kernel: bargrain_forward.3
$region0: #{bargrain_forward.3}
  #allocation0 [shape = 'u32[]', space=smem, size = 0x4, offset = 0x4, fixed_abs, tag = 'smem constant byte address 0x4 - core index']
  #allocation1 [shape = 'u32[144,128]{1,0:T(1,128)}', space=vmem, size = 0x12000, scoped, tag = 'internal scratch']
  %s0 = inlined_call_operand.vmem [shape: f32[2,8,8], index: 0, kind: input, shape index: {}]
  %s1 = inlined_call_operand.vmem [shape: f32[2,8,8], index: 1, kind: input, shape index: {}]
  %s2 = inlined_call_operand.vmem [shape: f32[2,8,8], index: 2, kind: input, shape index: {}]
  %s3 = inlined_call_operand.vmem [shape: f32[2,8,8], index: 3, kind: input, shape index: {}]
  %s4 = inlined_call_operand.vmem [shape: f32[1,8], index: 4, kind: input, shape index: {}]
  %s5 = inlined_call_operand.vmem [shape: f32[8,1], index: 5, kind: input, shape index: {}]
  %s6 = inlined_call_operand.vmem [shape: f32[8,16], index: 6, kind: input, shape index: {}]
  %s7 = inlined_call_operand.vmem [shape: f32[1,16], index: 7, kind: input, shape index: {}]
  %s8 = inlined_call_operand.vmem [shape: f32[16,8], index: 8, kind: input, shape index: {}]
  %s9 = inlined_call_operand.vmem [shape: f32[1,8], index: 9, kind: input, shape index: {}]
  %s10 = inlined_call_operand.vmem [shape: f32[2,8,8], index: 10, kind: output, shape index: {0}]
  %s11 = inlined_call_operand.vmem [shape: f32[2,8,8], index: 11, kind: output, shape index: {1}]
  %12 = xla_tuple %s10, %s11
  %s13 = sld [smem:[#allocation0]]
  $region81: #{bargrain_forward.3} parent=0
    _
  %s15 = ssub.s32 1, %s13
  %s16 = scalar_select 0, %s15, %s13
  loop: start=0, step=1, limit=4
  $region2: #{bargrain_forward.3} parent=0 // loop_pre_header
    _
  $region3: #{bargrain_forward.3} parent=0 // loop_header
    %s18 = sphi 0, %s22
    %p19 = scmp.ge.s32.totalorder %s18, 4
    %s28 = sphi 0, %s30
    %s31 = sphi 0, %s28
    %s32 = sphi 0, %s31
    %s48 = sphi 0, %s32
    %s54 = sphi 0, %s56
    %s57 = sphi 0, %s54
    %s58 = sphi 0, %s57
    %s74 = sphi 0, %s58
    %s80 = sphi 0, %s82
    %s83 = sphi 0, %s80
    %s84 = sphi 0, %s83
    %s100 = sphi 0, %s84
    %s106 = sphi 0, %s108
    %s109 = sphi 0, %s106
    %s110 = sphi 0, %s109
    %s126 = sphi 0, %s110
    %s130 = sphi 0, %s130
    %s132 = sphi 0, %s130
    %s133 = sphi 0, %s132
    %s147 = sphi 0, %s133
    %s151 = sphi 0, %s151
    %s153 = sphi 0, %s151
    %s154 = sphi 0, %s153
    %s168 = sphi 0, %s154
    %s172 = sphi 0, %s172
    %s174 = sphi 0, %s172
    %s175 = sphi 0, %s174
    %s189 = sphi 0, %s175
    %s193 = sphi 0, %s193
    %s195 = sphi 0, %s193
    %s196 = sphi 0, %s195
    %s210 = sphi 0, %s196
    %s214 = sphi 0, %s214
    %s216 = sphi 0, %s214
    %s217 = sphi 0, %s216
    %s231 = sphi 0, %s217
    %s235 = sphi 0, %s235
    %s237 = sphi 0, %s235
    %s238 = sphi 0, %s237
    %s252 = sphi 0, %s238
    %s258 = sphi 0, %s260
    %s261 = sphi 0, %s258
    %s262 = sphi 0, %s261
    %s278 = sphi 0, %s262
    %s284 = sphi 0, %s286
    %s287 = sphi 0, %s284
    %s288 = sphi 0, %s287
    %s304 = sphi 0, %s288
  $region4: #{bargrain_forward.3} parent=0 // loop_header_branch
    %21 = sbr.rel (%p19) target = $region8
  $region5: #{bargrain_forward.3} parent=0 // loop_body
    %s23 = ssub.s32 %s18, 1
    %s24 = ssub.s32 %s18, 2
    %s25 = sadd.s32 %s18, 1
    %s26 = ssub.s32 %s18, %s25
    %p27 = scmp.eq.s32.totalorder %s26, 0
    %s29 = sadd.s32 %s28, 1
    %s30 = scalar_select %p27, %s28, %s29
    %p33 = pneg %p27
    %p34 = scmp.eq.s32.totalorder %s18, 1
    %p35 = por %p33, %p34
    %p36 = scmp.ne.s32.totalorder %s28, %s31
    %p37 = scmp.eq.s32.totalorder %s18, 0
    %p38 = por %p36, %p37
    %p39 = scmp.ne.s32.totalorder %s28, %s31
    %p40 = scmp.eq.s32.totalorder %s23, 1
    %p41 = por %p39, %p40
    %p42 = scmp.ne.s32.totalorder %s31, %s32
    %p43 = scmp.eq.s32.totalorder %s23, 0
    %p44 = por %p42, %p43
    %p45 = scmp.ne.s32.totalorder %s31, %s32
    %p46 = scmp.eq.s32.totalorder %s24, 1
    %p47 = por %p45, %p46
    %p49 = scmp.ne.s32.totalorder %s32, %s48
    %p50 = scmp.eq.s32.totalorder %s24, 0
    %p51 = por %p49, %p50
    %s52 = ssub.s32 %s18, %s25
    %p53 = scmp.eq.s32.totalorder %s52, 0
    %s55 = sadd.s32 %s54, 1
    %s56 = scalar_select %p53, %s54, %s55
    %p59 = pneg %p53
    %p60 = scmp.eq.s32.totalorder %s18, 1
    %p61 = por %p59, %p60
    %p62 = scmp.ne.s32.totalorder %s54, %s57
    %p63 = scmp.eq.s32.totalorder %s18, 0
    %p64 = por %p62, %p63
    %p65 = scmp.ne.s32.totalorder %s54, %s57
    %p66 = scmp.eq.s32.totalorder %s23, 1
    %p67 = por %p65, %p66
    %p68 = scmp.ne.s32.totalorder %s57, %s58
    %p69 = scmp.eq.s32.totalorder %s23, 0
    %p70 = por %p68, %p69
    %p71 = scmp.ne.s32.totalorder %s57, %s58
    %p72 = scmp.eq.s32.totalorder %s24, 1
    %p73 = por %p71, %p72
    %p75 = scmp.ne.s32.totalorder %s58, %s74
    %p76 = scmp.eq.s32.totalorder %s24, 0
    %p77 = por %p75, %p76
    %s78 = ssub.s32 %s18, %s25
    %p79 = scmp.eq.s32.totalorder %s78, 0
    %s81 = sadd.s32 %s80, 1
    %s82 = scalar_select %p79, %s80, %s81
    %p85 = pneg %p79
    %p86 = scmp.eq.s32.totalorder %s18, 1
    %p87 = por %p85, %p86
    %p88 = scmp.ne.s32.totalorder %s80, %s83
    %p89 = scmp.eq.s32.totalorder %s18, 0
    %p90 = por %p88, %p89
    %p91 = scmp.ne.s32.totalorder %s80, %s83
    %p92 = scmp.eq.s32.totalorder %s23, 1
    %p93 = por %p91, %p92
    %p94 = scmp.ne.s32.totalorder %s83, %s84
    %p95 = scmp.eq.s32.totalorder %s23, 0
    %p96 = por %p94, %p95
    %p97 = scmp.ne.s32.totalorder %s83, %s84
    %p98 = scmp.eq.s32.totalorder %s24, 1
    %p99 = por %p97, %p98
    %p101 = scmp.ne.s32.totalorder %s84, %s100
    %p102 = scmp.eq.s32.totalorder %s24, 0
    %p103 = por %p101, %p102
    %s104 = ssub.s32 %s18, %s25
    %p105 = scmp.eq.s32.totalorder %s104, 0
    %s107 = sadd.s32 %s106, 1
    %s108 = scalar_select %p105, %s106, %s107
    %p111 = pneg %p105
    %p112 = scmp.eq.s32.totalorder %s18, 1
    %p113 = por %p111, %p112
    %p114 = scmp.ne.s32.totalorder %s106, %s109
    %p115 = scmp.eq.s32.totalorder %s18, 0
    %p116 = por %p114, %p115
    %p117 = scmp.ne.s32.totalorder %s106, %s109
    %p118 = scmp.eq.s32.totalorder %s23, 1
    %p119 = por %p117, %p118
    %p120 = scmp.ne.s32.totalorder %s109, %s110
    %p121 = scmp.eq.s32.totalorder %s23, 0
    %p122 = por %p120, %p121
    %p123 = scmp.ne.s32.totalorder %s109, %s110
    %p124 = scmp.eq.s32.totalorder %s24, 1
    %p125 = por %p123, %p124
    %p127 = scmp.ne.s32.totalorder %s110, %s126
    %p128 = scmp.eq.s32.totalorder %s24, 0
    %p129 = por %p127, %p128
    %s131 = sadd.s32 %s130, 1
    %p134 = scmp.eq.s32.totalorder %s18, 1
    %p135 = scmp.ne.s32.totalorder %s130, %s132
    %p136 = scmp.eq.s32.totalorder %s18, 0
    %p137 = por %p135, %p136
    %p138 = scmp.ne.s32.totalorder %s130, %s132
    %p139 = scmp.eq.s32.totalorder %s23, 1
    %p140 = por %p138, %p139
    %p141 = scmp.ne.s32.totalorder %s132, %s133
    %p142 = scmp.eq.s32.totalorder %s23, 0
    %p143 = por %p141, %p142
    %p144 = scmp.ne.s32.totalorder %s132, %s133
    %p145 = scmp.eq.s32.totalorder %s24, 1
    %p146 = por %p144, %p145
    %p148 = scmp.ne.s32.totalorder %s133, %s147
    %p149 = scmp.eq.s32.totalorder %s24, 0
    %p150 = por %p148, %p149
    %s152 = sadd.s32 %s151, 1
    %p155 = scmp.eq.s32.totalorder %s18, 1
    %p156 = scmp.ne.s32.totalorder %s151, %s153
    %p157 = scmp.eq.s32.totalorder %s18, 0
    %p158 = por %p156, %p157
    %p159 = scmp.ne.s32.totalorder %s151, %s153
    %p160 = scmp.eq.s32.totalorder %s23, 1
    %p161 = por %p159, %p160
    %p162 = scmp.ne.s32.totalorder %s153, %s154
    %p163 = scmp.eq.s32.totalorder %s23, 0
    %p164 = por %p162, %p163
    %p165 = scmp.ne.s32.totalorder %s153, %s154
    %p166 = scmp.eq.s32.totalorder %s24, 1
    %p167 = por %p165, %p166
    %p169 = scmp.ne.s32.totalorder %s154, %s168
    %p170 = scmp.eq.s32.totalorder %s24, 0
    %p171 = por %p169, %p170
    %s173 = sadd.s32 %s172, 1
    %p176 = scmp.eq.s32.totalorder %s18, 1
    %p177 = scmp.ne.s32.totalorder %s172, %s174
    %p178 = scmp.eq.s32.totalorder %s18, 0
    %p179 = por %p177, %p178
    %p180 = scmp.ne.s32.totalorder %s172, %s174
    %p181 = scmp.eq.s32.totalorder %s23, 1
    %p182 = por %p180, %p181
    %p183 = scmp.ne.s32.totalorder %s174, %s175
    %p184 = scmp.eq.s32.totalorder %s23, 0
    %p185 = por %p183, %p184
    %p186 = scmp.ne.s32.totalorder %s174, %s175
    %p187 = scmp.eq.s32.totalorder %s24, 1
    %p188 = por %p186, %p187
    %p190 = scmp.ne.s32.totalorder %s175, %s189
    %p191 = scmp.eq.s32.totalorder %s24, 0
    %p192 = por %p190, %p191
    %s194 = sadd.s32 %s193, 1
    %p197 = scmp.eq.s32.totalorder %s18, 1
    %p198 = scmp.ne.s32.totalorder %s193, %s195
    %p199 = scmp.eq.s32.totalorder %s18, 0
    %p200 = por %p198, %p199
    %p201 = scmp.ne.s32.totalorder %s193, %s195
    %p202 = scmp.eq.s32.totalorder %s23, 1
    %p203 = por %p201, %p202
    %p204 = scmp.ne.s32.totalorder %s195, %s196
    %p205 = scmp.eq.s32.totalorder %s23, 0
    %p206 = por %p204, %p205
    %p207 = scmp.ne.s32.totalorder %s195, %s196
    %p208 = scmp.eq.s32.totalorder %s24, 1
    %p209 = por %p207, %p208
    %p211 = scmp.ne.s32.totalorder %s196, %s210
    %p212 = scmp.eq.s32.totalorder %s24, 0
    %p213 = por %p211, %p212
    %s215 = sadd.s32 %s214, 1
    %p218 = scmp.eq.s32.totalorder %s18, 1
    %p219 = scmp.ne.s32.totalorder %s214, %s216
    %p220 = scmp.eq.s32.totalorder %s18, 0
    %p221 = por %p219, %p220
    %p222 = scmp.ne.s32.totalorder %s214, %s216
    %p223 = scmp.eq.s32.totalorder %s23, 1
    %p224 = por %p222, %p223
    %p225 = scmp.ne.s32.totalorder %s216, %s217
    %p226 = scmp.eq.s32.totalorder %s23, 0
    %p227 = por %p225, %p226
    %p228 = scmp.ne.s32.totalorder %s216, %s217
    %p229 = scmp.eq.s32.totalorder %s24, 1
    %p230 = por %p228, %p229
    %p232 = scmp.ne.s32.totalorder %s217, %s231
    %p233 = scmp.eq.s32.totalorder %s24, 0
    %p234 = por %p232, %p233
    %s236 = sadd.s32 %s235, 1
    %p239 = scmp.eq.s32.totalorder %s18, 1
    %p240 = scmp.ne.s32.totalorder %s235, %s237
    %p241 = scmp.eq.s32.totalorder %s18, 0
    %p242 = por %p240, %p241
    %p243 = scmp.ne.s32.totalorder %s235, %s237
    %p244 = scmp.eq.s32.totalorder %s23, 1
    %p245 = por %p243, %p244
    %p246 = scmp.ne.s32.totalorder %s237, %s238
    %p247 = scmp.eq.s32.totalorder %s23, 0
    %p248 = por %p246, %p247
    %p249 = scmp.ne.s32.totalorder %s237, %s238
    %p250 = scmp.eq.s32.totalorder %s24, 1
    %p251 = por %p249, %p250
    %p253 = scmp.ne.s32.totalorder %s238, %s252
    %p254 = scmp.eq.s32.totalorder %s24, 0
    %p255 = por %p253, %p254
    %s256 = ssub.s32 %s18, %s25
    %p257 = scmp.eq.s32.totalorder %s256, 0
    %s259 = sadd.s32 %s258, 1
    %s260 = scalar_select %p257, %s258, %s259
    %p263 = pneg %p257
    %p264 = scmp.eq.s32.totalorder %s18, 1
    %p265 = por %p263, %p264
    %p266 = scmp.ne.s32.totalorder %s258, %s261
    %p267 = scmp.eq.s32.totalorder %s18, 0
    %p268 = por %p266, %p267
    %p269 = scmp.ne.s32.totalorder %s258, %s261
    %p270 = scmp.eq.s32.totalorder %s23, 1
    %p271 = por %p269, %p270
    %p272 = scmp.ne.s32.totalorder %s261, %s262
    %p273 = scmp.eq.s32.totalorder %s23, 0
    %p274 = por %p272, %p273
    %p275 = scmp.ne.s32.totalorder %s261, %s262
    %p276 = scmp.eq.s32.totalorder %s24, 1
    %p277 = por %p275, %p276
    %p279 = scmp.ne.s32.totalorder %s262, %s278
    %p280 = scmp.eq.s32.totalorder %s24, 0
    %p281 = por %p279, %p280
    %s282 = ssub.s32 %s18, %s25
    %p283 = scmp.eq.s32.totalorder %s282, 0
    %s285 = sadd.s32 %s284, 1
    %s286 = scalar_select %p283, %s284, %s285
    %p289 = pneg %p283
    %p290 = scmp.eq.s32.totalorder %s18, 1
    %p291 = por %p289, %p290
    %p292 = scmp.ne.s32.totalorder %s284, %s287
    %p293 = scmp.eq.s32.totalorder %s18, 0
    %p294 = por %p292, %p293
    %p295 = scmp.ne.s32.totalorder %s284, %s287
    %p296 = scmp.eq.s32.totalorder %s23, 1
    %p297 = por %p295, %p296
    %p298 = scmp.ne.s32.totalorder %s287, %s288
    %p299 = scmp.eq.s32.totalorder %s23, 0
    %p300 = por %p298, %p299
    %p301 = scmp.ne.s32.totalorder %s287, %s288
    %p302 = scmp.eq.s32.totalorder %s24, 1
    %p303 = por %p301, %p302
    %p305 = scmp.ne.s32.totalorder %s288, %s304
    %p306 = scmp.eq.s32.totalorder %s24, 0
    %p307 = por %p305, %p306
    %p308 = scmp.le.s32.totalorder 1, %s18
    %p309 = scmp.lt.s32.totalorder %s18, 3
    %p310 = pnand %p308, %p309
    %p311 = pneg %p310
    // Predicated region
    $region9: #{bargrain_forward.3} parent=5 // pred_check
      _
    $region10: #{bargrain_forward.3} parent=5 // pred_check_branch
      %313 = sbr.rel (%p310) target = $region12
    $region11: #{bargrain_forward.3} parent=5 // pred_region
      %s314 = ssub.s32 %s18, 1
      // Predicated region
      $region13: #{bargrain_forward.3} parent=11 // pred_check
        %p315 = pneg %p143
      $region14: #{bargrain_forward.3} parent=11 // pred_check_branch
        %317 = sbr.rel (%p315) target = $region16
      $region15: #{bargrain_forward.3} parent=11 // pred_region
        _
      $region16: #{bargrain_forward.3} parent=11 // pred_fallthru
        _
      // Predicated region
      $region17: #{bargrain_forward.3} parent=11 // pred_check
        %p318 = pneg %p164
      $region18: #{bargrain_forward.3} parent=11 // pred_check_branch
        %320 = sbr.rel (%p318) target = $region20
      $region19: #{bargrain_forward.3} parent=11 // pred_region
        _
      $region20: #{bargrain_forward.3} parent=11 // pred_fallthru
        _
      // Predicated region
      $region21: #{bargrain_forward.3} parent=11 // pred_check
        %p321 = pneg %p185
      $region22: #{bargrain_forward.3} parent=11 // pred_check_branch
        %323 = sbr.rel (%p321) target = $region24
      $region23: #{bargrain_forward.3} parent=11 // pred_region
        _
      $region24: #{bargrain_forward.3} parent=11 // pred_fallthru
        _
      // Predicated region
      $region25: #{bargrain_forward.3} parent=11 // pred_check
        %p324 = pneg %p206
      $region26: #{bargrain_forward.3} parent=11 // pred_check_branch
        %326 = sbr.rel (%p324) target = $region28
      $region27: #{bargrain_forward.3} parent=11 // pred_region
        _
      $region28: #{bargrain_forward.3} parent=11 // pred_fallthru
        _
      // Predicated region
      $region29: #{bargrain_forward.3} parent=11 // pred_check
        %p327 = pneg %p227
      $region30: #{bargrain_forward.3} parent=11 // pred_check_branch
        %329 = sbr.rel (%p327) target = $region32
      $region31: #{bargrain_forward.3} parent=11 // pred_region
        _
      $region32: #{bargrain_forward.3} parent=11 // pred_fallthru
        _
      // Predicated region
      $region33: #{bargrain_forward.3} parent=11 // pred_check
        %p330 = pneg %p248
      $region34: #{bargrain_forward.3} parent=11 // pred_check_branch
        %332 = sbr.rel (%p330) target = $region36
      $region35: #{bargrain_forward.3} parent=11 // pred_region
        _
      $region36: #{bargrain_forward.3} parent=11 // pred_fallthru
        _
    $region12: #{bargrain_forward.3} parent=5 // pred_fallthru
      _
    %p333 = scmp.lt.s32.totalorder %s18, 2
    // Predicated region
    $region37: #{bargrain_forward.3} parent=5 // pred_check
      %p334 = pneg %p333
    $region38: #{bargrain_forward.3} parent=5 // pred_check_branch
      %336 = sbr.rel (%p334) target = $region40
    $region39: #{bargrain_forward.3} parent=5 // pred_region
      // Predicated region
      $region41: #{bargrain_forward.3} parent=39 // pred_check
        %p337 = pneg %p38
      $region42: #{bargrain_forward.3} parent=39 // pred_check_branch
        %339 = sbr.rel (%p337) target = $region44
      $region43: #{bargrain_forward.3} parent=39 // pred_region
        %p340 = scmp.lt.s32.totalorder %s18, 1
        %s341 = scalar_select %p340, %s18, 1
        %s342 = smul.addr %s341, 8
        %s343 = scalar_lea.vmem %s0, %s342
      $region44: #{bargrain_forward.3} parent=39 // pred_fallthru
        _
      // Predicated region
      $region45: #{bargrain_forward.3} parent=39 // pred_check
        %p344 = pneg %p64
      $region46: #{bargrain_forward.3} parent=39 // pred_check_branch
        %346 = sbr.rel (%p344) target = $region48
      $region47: #{bargrain_forward.3} parent=39 // pred_region
        %p347 = scmp.lt.s32.totalorder %s18, 1
        %s348 = scalar_select %p347, %s18, 1
        %s349 = smul.addr %s348, 8
        %s350 = scalar_lea.vmem %s1, %s349
      $region48: #{bargrain_forward.3} parent=39 // pred_fallthru
        _
      // Predicated region
      $region49: #{bargrain_forward.3} parent=39 // pred_check
        %p351 = pneg %p90
      $region50: #{bargrain_forward.3} parent=39 // pred_check_branch
        %353 = sbr.rel (%p351) target = $region52
      $region51: #{bargrain_forward.3} parent=39 // pred_region
        %p354 = scmp.lt.s32.totalorder %s18, 1
        %s355 = scalar_select %p354, %s18, 1
        %s356 = smul.addr %s355, 8
        %s357 = scalar_lea.vmem %s2, %s356
      $region52: #{bargrain_forward.3} parent=39 // pred_fallthru
        _
      // Predicated region
      $region53: #{bargrain_forward.3} parent=39 // pred_check
        %p358 = pneg %p116
      $region54: #{bargrain_forward.3} parent=39 // pred_check_branch
        %360 = sbr.rel (%p358) target = $region56
      $region55: #{bargrain_forward.3} parent=39 // pred_region
        %p361 = scmp.lt.s32.totalorder %s18, 1
        %s362 = scalar_select %p361, %s18, 1
        %s363 = smul.addr %s362, 8
        %s364 = scalar_lea.vmem %s3, %s363
      $region56: #{bargrain_forward.3} parent=39 // pred_fallthru
        _
    $region40: #{bargrain_forward.3} parent=5 // pred_fallthru
      _
    %p365 = scmp.le.s32.totalorder 1, %s18
    %p366 = scmp.lt.s32.totalorder %s18, 3
    %p367 = pnand %p365, %p366
    %p368 = pneg %p367
    // Predicated region
    $region57: #{bargrain_forward.3} parent=5 // pred_check
      _
    $region58: #{bargrain_forward.3} parent=5 // pred_check_branch
      %370 = sbr.rel (%p367) target = $region60
    $region59: #{bargrain_forward.3} parent=5 // pred_region
      %s371 = ssub.s32 %s18, 1
      %p372 = scmp.lt.s32.totalorder %s23, 1
      %s373 = scalar_select %p372, %s23, 1
      %s374 = smul.addr %s373, 8
      %s375 = scalar_lea.vmem %s0, %s374
      %p376 = pneg %p44
      %p377 = pneg %p41
      %p378 = scmp.lt.s32.totalorder %s23, 1
      %s379 = scalar_select %p378, %s23, 1
      %s380 = smul.addr %s379, 8
      %s381 = scalar_lea.vmem %s1, %s380
      %p382 = pneg %p70
      %p383 = pneg %p67
      %p384 = scmp.lt.s32.totalorder %s23, 1
      %s385 = scalar_select %p384, %s23, 1
      %s386 = smul.addr %s385, 8
      %s387 = scalar_lea.vmem %s2, %s386
      %p388 = pneg %p96
      %p389 = pneg %p93
      %p390 = scmp.lt.s32.totalorder %s23, 1
      %s391 = scalar_select %p390, %s23, 1
      %s392 = smul.addr %s391, 8
      %s393 = scalar_lea.vmem %s3, %s392
      %p394 = pneg %p122
      %p395 = pneg %p119
      %p396 = pneg %p143
      %p397 = pneg %p140
      %p398 = pneg %p164
      %p399 = pneg %p161
      %p400 = pneg %p185
      %p401 = pneg %p182
      %p402 = pneg %p206
      %p403 = pneg %p203
      %p404 = pneg %p227
      %p405 = pneg %p224
      %p406 = pneg %p248
      %p407 = pneg %p245
      %p408 = pneg %p274
      %p409 = pneg %p271
      %p410 = scmp.lt.s32.totalorder %s23, 1
      %s411 = scalar_select %p410, %s23, 1
      %s412 = smul.addr %s411, 8
      %s413 = scalar_lea.vmem %s10, %s412
      %p414 = pneg %p300
      %p415 = pneg %p297
      %p416 = scmp.lt.s32.totalorder %s23, 1
      %s417 = scalar_select %p416, %s23, 1
      %s418 = smul.addr %s417, 8
      %s419 = scalar_lea.vmem %s11, %s418
      %p420 = scmp.lt.s32.totalorder %s23, 1
      %s421 = scalar_select %p420, %s23, 1
      %s422 = smul.addr %s421, 8
      %s423 = scalar_lea.vmem %s0, %s422
      %p424 = scmp.lt.s32.totalorder %s23, 1
      %s425 = scalar_select %p424, %s23, 1
      %s426 = smul.addr %s425, 8
      %s427 = scalar_lea.vmem %s1, %s426
      %p428 = scmp.lt.s32.totalorder %s23, 1
      %s429 = scalar_select %p428, %s23, 1
      %s430 = smul.addr %s429, 8
      %s431 = scalar_lea.vmem %s2, %s430
      %p432 = scmp.lt.s32.totalorder %s23, 1
      %s433 = scalar_select %p432, %s23, 1
      %s434 = smul.addr %s433, 8
      %s435 = scalar_lea.vmem %s3, %s434
      %p436 = scmp.lt.s32.totalorder %s23, 1
      %s437 = scalar_select %p436, %s23, 1
      %s438 = smul.addr %s437, 8
      %s439 = scalar_lea.vmem %s10, %s438
      %p440 = scmp.lt.s32.totalorder %s23, 1
      %s441 = scalar_select %p440, %s23, 1
      %s442 = smul.addr %s441, 8
      %s443 = scalar_lea.vmem %s11, %s442
      %v444 = vld [vmem:[%s423] sm:$0xff]
      %v445 = vld [vmem:[%s427] sm:$0xff]
      %v446 = vld [vmem:[%s431] sm:$0xff]
      %v447 = vld [vmem:[%s435] sm:$0xff]
      %v448 = vmax.f32 %v444, 0.0
      %v449 = vmax.f32 %v445, 0.0
      %v450 = vld [vmem:[%s4] sm:$0x1]
      %v452 = vlaneseq
      %v453 = vshrl.u32 %v452, 7
      %v454 = vsub.s32 0, %v453
      %v455 = vrot.slane %v450, %v454
      %v457 = vmul.f32 %v448, %v455
      %vm458 = vcmask 64512
      %v459 = vsel %vm458, %v457, 0.0
      %460 = vadd.xlane.f32.xlu0 %v459
      %v461 = vpop.xlane.xlu0 %460
      %v462 = vld [vmem:[%s5] sm:$0xff]
      %464 = vset.pattern.permute.xlu0 0
      %465 = vperm.xlu0 %464, %v462
      %v466 = vpop.permute.xlu0 %465
      %v468 = vmul.f32 %v449, %v466
      %v469 = vsel %vm458, %v468, 0.0
      %v470 = vrot.slane %v469, 4
      %v471 = vadd.f32 %v469, %v470
      %v472 = vrot.slane %v471, 2
      %v473 = vadd.f32 %v471, %v472
      %v474 = vrot.slane %v473, 1
      %v475 = vadd.f32 %v473, %v474
      %v476 = vadd.f32 %v461, %v475
      %v477 = vadd.f32 %v476, %v447
      %vm478 = vcmp.ge.f32.partialorder %v477, 0.0
      %v479 = vsel %vm478, 1.0, 0.0
      %480 = vst.msk [vmem:[%s443] sm:$0xff] %vm458, %v479
      %v481 = vld [vmem:[%s6] sm:$0xff]
      %v482 = vld [vmem:[%s7] sm:$0x1]
      %v483 = vld [vmem:[%s8] sm:$0xff]
      %v484 = vld [vmem:[%s8 + $0x8] sm:$0xff]
      %v485 = vld [vmem:[%s9] sm:$0x1]
      %v486 = vlaneseq
      %v487 = vshrl.u32 %v486, 7
      %v488 = vlaneseq
      %v489 = vand.u32 %v488, 127
      %vm490 = vcmp.eq.s32.totalorder %v487, %v489
      %v491 = vsel %vm490, 1.0, 0.0
      %v492 = vmax.f32 %v479, %v491
      %v493 = vsel %vm458, %v492, 0.0
      %v494 = vrot.slane %v493, 4
      %v495 = vadd.f32 %v493, %v494
      %v496 = vrot.slane %v495, 2
      %v497 = vadd.f32 %v495, %v496
      %v498 = vrot.slane %v497, 1
      %v499 = vadd.f32 %v497, %v498
      %vm500 = vcmp.gt.f32.partialorder %v499, 0.0
      %v501 = vrsqrt.pop %v499
      %v502 = vmul.f32 %v499, %v501
      %vm503 = vcmp.eq.f32.partialorder %v499, inf
      %v504 = vsel %vm503, %v499, %v502
      %vm505 = vcmp.eq.f32.partialorder %v499, 0.0
      %v506 = vand.u32 %v499, 2147483648
      %v507 = vsel %vm505, %v506, %v504
      %v508 = vrcp.pop %v507
      %v509 = vmul.f32 1.0, %v508
      %v510 = vsel %vm500, %v509, 0.0
      %v511 = vmul.f32 %v492, %v510
      %512 = vxpose.xlu0.b32.start [1/16] %v511, 128
      %513 = vxpose.xlu0.b32.cont [2/16] 0.0, 128
      %514 = vxpose.xlu0.b32.cont [3/16] 0.0, 128
      %515 = vxpose.xlu0.b32.cont [4/16] 0.0, 128
      %516 = vxpose.xlu0.b32.cont [5/16] 0.0, 128
      %517 = vxpose.xlu0.b32.cont [6/16] 0.0, 128
      %518 = vxpose.xlu0.b32.cont [7/16] 0.0, 128
      %519 = vxpose.xlu0.b32.cont [8/16] 0.0, 128
      %520 = vxpose.xlu0.b32.cont [9/16] 0.0, 128
      %521 = vxpose.xlu0.b32.cont [10/16] 0.0, 128
      %522 = vxpose.xlu0.b32.cont [11/16] 0.0, 128
      %523 = vxpose.xlu0.b32.cont [12/16] 0.0, 128
      %524 = vxpose.xlu0.b32.cont [13/16] 0.0, 128
      %525 = vxpose.xlu0.b32.cont [14/16] 0.0, 128
      %526 = vxpose.xlu0.b32.cont [15/16] 0.0, 128
      %527 = vxpose.xlu0.b32.end [16/16] 0.0, 128
      %v528 = vpop.trf.xlu0
      %v529 = vpop.trf.xlu0
      %v530 = vpop.trf.xlu0
      %v531 = vpop.trf.xlu0
      %v532 = vpop.trf.xlu0
      %v533 = vpop.trf.xlu0
      %v534 = vpop.trf.xlu0
      %v535 = vpop.trf.xlu0
      %v536 = vpop.trf.xlu0
      %v537 = vpop.trf.xlu0
      %v538 = vpop.trf.xlu0
      %v539 = vpop.trf.xlu0
      %v540 = vpop.trf.xlu0
      %v541 = vpop.trf.xlu0
      %v542 = vpop.trf.xlu0
      %v543 = vpop.trf.xlu0
      %v544 = vmul.f32 %v528, %v510
      %v546 = vsel %vm458, %v446, 0
      %548 = vmatprep.subr.mxu0 0.0
      %549 = vmatpush1.msra.mxu0 %v481
      %550 = vmatprep.subr.mxu0 0.0
      %551 = vmatpush1.msra.mxu0 0.0
      %552 = vmatprep.subr.mxu0 0.0
      %553 = vmatpush1.msra.mxu0 0.0
      %554 = vmatprep.subr.mxu0 0.0
      %555 = vmatpush1.msra.mxu0 0.0
      %556 = vmatprep.subr.mxu0 0.0
      %557 = vmatpush1.msra.mxu0 0.0
      %558 = vmatprep.subr.mxu0 0.0
      %559 = vmatpush1.msra.mxu0 0.0
      %560 = vmatprep.subr.mxu0 0.0
      %561 = vmatpush1.msra.mxu0 0.0
      %562 = vmatprep.subr.mxu0 0.0
      %563 = vmatpush1.msra.mxu0 0.0
      %564 = vmatprep.subr.mxu0 0.0
      %565 = vmatpush1.msra.mxu0 0.0
      %566 = vmatprep.subr.mxu0 0.0
      %567 = vmatpush1.msra.mxu0 0.0
      %568 = vmatprep.subr.mxu0 0.0
      %569 = vmatpush1.msra.mxu0 0.0
      %570 = vmatprep.subr.mxu0 0.0
      %571 = vmatpush1.msra.mxu0 0.0
      %572 = vmatprep.subr.mxu0 0.0
      %573 = vmatpush1.msra.mxu0 0.0
      %574 = vmatprep.subr.mxu0 0.0
      %575 = vmatpush1.msra.mxu0 0.0
      %576 = vmatprep.subr.mxu0 0.0
      %577 = vmatpush1.msra.mxu0 0.0
      %578 = vmatprep.subr.mxu0 0.0
      %579 = vmatpush1.msra.mxu0 0.0
      %580 = vmatprep.subr.mxu0 0.0
      %581 = vmatpush1.msra.mxu0 0.0
      %582 = vmatprep.subr.mxu0 0.0
      %583 = vmatpush1.msra.mxu0 0.0
      %584 = vmatprep.subr.mxu0 0.0
      %585 = vmatpush1.msra.mxu0 0.0
      %586 = vmatprep.subr.mxu0 0.0
      %587 = vmatpush1.msra.mxu0 0.0
      %588 = vmatprep.subr.mxu0 0.0
      %589 = vmatpush1.msra.mxu0 0.0
      %590 = vmatprep.subr.mxu0 0.0
      %591 = vmatpush1.msra.mxu0 0.0
      %592 = vmatprep.subr.mxu0 0.0
      %593 = vmatpush1.msra.mxu0 0.0
      %594 = vmatprep.subr.mxu0 0.0
      %595 = vmatpush1.msra.mxu0 0.0
      %596 = vmatprep.subr.mxu0 0.0
      %597 = vmatpush1.msra.mxu0 0.0
      %598 = vmatprep.subr.mxu0 0.0
      %599 = vmatpush1.msra.mxu0 0.0
      %600 = vmatprep.subr.mxu0 0.0
      %601 = vmatpush1.msra.mxu0 0.0
      %602 = vmatprep.subr.mxu0 0.0
      %603 = vmatpush1.msra.mxu0 0.0
      %604 = vmatprep.subr.mxu0 0.0
      %605 = vmatpush1.msra.mxu0 0.0
      %606 = vmatprep.subr.mxu0 0.0
      %607 = vmatpush1.msra.mxu0 0.0
      %608 = vmatprep.subr.mxu0 0.0
      %609 = vmatpush1.msra.mxu0 0.0
      %610 = vmatprep.subr.mxu0 0.0
      %611 = vmatpush1.msra.mxu0 0.0
      %612 = vmatprep.mubr.f32.mxu0 0.0
      %613 = vmatmul.mubr.f32.gmra.mrb[0].mxu0 %v546
      %v614 = vpop.f32.mrb[0].mxu0
      %v615 = vadd.f32 0.0, %v614
      %v616 = vpop.f32.mrb[0].mxu0
      %617 = vdwg.mxu0
      %v619 = vlaneseq
      %v620 = vshrl.u32 %v619, 7
      %v621 = vsub.s32 0, %v620
      %v622 = vrot.slane %v482, %v621
      %v625 = vsel %vm458, %v544, 0
      %627 = vmatprep.subr.mxu0 0.0
      %628 = vmatpush1.msra.mxu0 %v615
      %629 = vmatprep.subr.mxu0 0.0
      %630 = vmatpush1.msra.mxu0 0.0
      %631 = vmatprep.subr.mxu0 0.0
      %632 = vmatpush1.msra.mxu0 0.0
      %633 = vmatprep.subr.mxu0 0.0
      %634 = vmatpush1.msra.mxu0 0.0
      %635 = vmatprep.subr.mxu0 0.0
      %636 = vmatpush1.msra.mxu0 0.0
      %637 = vmatprep.subr.mxu0 0.0
      %638 = vmatpush1.msra.mxu0 0.0
      %639 = vmatprep.subr.mxu0 0.0
      %640 = vmatpush1.msra.mxu0 0.0
      %641 = vmatprep.subr.mxu0 0.0
      %642 = vmatpush1.msra.mxu0 0.0
      %643 = vmatprep.subr.mxu0 0.0
      %644 = vmatpush1.msra.mxu0 0.0
      %645 = vmatprep.subr.mxu0 0.0
      %646 = vmatpush1.msra.mxu0 0.0
      %647 = vmatprep.subr.mxu0 0.0
      %648 = vmatpush1.msra.mxu0 0.0
      %649 = vmatprep.subr.mxu0 0.0
      %650 = vmatpush1.msra.mxu0 0.0
      %651 = vmatprep.subr.mxu0 0.0
      %652 = vmatpush1.msra.mxu0 0.0
      %653 = vmatprep.subr.mxu0 0.0
      %654 = vmatpush1.msra.mxu0 0.0
      %655 = vmatprep.subr.mxu0 0.0
      %656 = vmatpush1.msra.mxu0 0.0
      %657 = vmatprep.subr.mxu0 0.0
      %658 = vmatpush1.msra.mxu0 0.0
      %659 = vmatprep.subr.mxu0 0.0
      %660 = vmatpush1.msra.mxu0 0.0
      %661 = vmatprep.subr.mxu0 0.0
      %662 = vmatpush1.msra.mxu0 0.0
      %663 = vmatprep.subr.mxu0 0.0
      %664 = vmatpush1.msra.mxu0 0.0
      %665 = vmatprep.subr.mxu0 0.0
      %666 = vmatpush1.msra.mxu0 0.0
      %667 = vmatprep.subr.mxu0 0.0
      %668 = vmatpush1.msra.mxu0 0.0
      %669 = vmatprep.subr.mxu0 0.0
      %670 = vmatpush1.msra.mxu0 0.0
      %671 = vmatprep.subr.mxu0 0.0
      %672 = vmatpush1.msra.mxu0 0.0
      %673 = vmatprep.subr.mxu0 0.0
      %674 = vmatpush1.msra.mxu0 0.0
      %675 = vmatprep.subr.mxu0 0.0
      %676 = vmatpush1.msra.mxu0 0.0
      %677 = vmatprep.subr.mxu0 0.0
      %678 = vmatpush1.msra.mxu0 0.0
      %679 = vmatprep.subr.mxu0 0.0
      %680 = vmatpush1.msra.mxu0 0.0
      %681 = vmatprep.subr.mxu0 0.0
      %682 = vmatpush1.msra.mxu0 0.0
      %683 = vmatprep.subr.mxu0 0.0
      %684 = vmatpush1.msra.mxu0 0.0
      %685 = vmatprep.subr.mxu0 0.0
      %686 = vmatpush1.msra.mxu0 0.0
      %687 = vmatprep.subr.mxu0 0.0
      %688 = vmatpush1.msra.mxu0 0.0
      %689 = vmatprep.subr.mxu0 0.0
      %690 = vmatpush1.msra.mxu0 0.0
      %691 = vmatprep.mubr.f32.mxu0 0.0
      %692 = vmatmul.mubr.f32.gmra.mrb[0].mxu0 %v625
      %v693 = vpop.f32.mrb[0].mxu0
      %v694 = vadd.f32 %v622, %v693
      %v695 = vpop.f32.mrb[0].mxu0
      %696 = vdwg.mxu0
      %v697 = vmax.f32 %v694, 0.0
      %vm698 = vcmask 130048
      %v700 = vsel %vm698, %v697, 0
      %702 = vmatprep.subr.mxu0 0.0
      %703 = vmatpush1.msra.mxu0 %v483
      %704 = vmatprep.subr.mxu0 0.0
      %705 = vmatpush1.msra.mxu0 %v484
      %706 = vmatprep.subr.mxu0 0.0
      %707 = vmatpush1.msra.mxu0 0.0
      %708 = vmatprep.subr.mxu0 0.0
      %709 = vmatpush1.msra.mxu0 0.0
      %710 = vmatprep.subr.mxu0 0.0
      %711 = vmatpush1.msra.mxu0 0.0
      %712 = vmatprep.subr.mxu0 0.0
      %713 = vmatpush1.msra.mxu0 0.0
      %714 = vmatprep.subr.mxu0 0.0
      %715 = vmatpush1.msra.mxu0 0.0
      %716 = vmatprep.subr.mxu0 0.0
      %717 = vmatpush1.msra.mxu0 0.0
      %718 = vmatprep.subr.mxu0 0.0
      %719 = vmatpush1.msra.mxu0 0.0
      %720 = vmatprep.subr.mxu0 0.0
      %721 = vmatpush1.msra.mxu0 0.0
      %722 = vmatprep.subr.mxu0 0.0
      %723 = vmatpush1.msra.mxu0 0.0
      %724 = vmatprep.subr.mxu0 0.0
      %725 = vmatpush1.msra.mxu0 0.0
      %726 = vmatprep.subr.mxu0 0.0
      %727 = vmatpush1.msra.mxu0 0.0
      %728 = vmatprep.subr.mxu0 0.0
      %729 = vmatpush1.msra.mxu0 0.0
      %730 = vmatprep.subr.mxu0 0.0
      %731 = vmatpush1.msra.mxu0 0.0
      %732 = vmatprep.subr.mxu0 0.0
      %733 = vmatpush1.msra.mxu0 0.0
      %734 = vmatprep.subr.mxu0 0.0
      %735 = vmatpush1.msra.mxu0 0.0
      %736 = vmatprep.subr.mxu0 0.0
      %737 = vmatpush1.msra.mxu0 0.0
      %738 = vmatprep.subr.mxu0 0.0
      %739 = vmatpush1.msra.mxu0 0.0
      %740 = vmatprep.subr.mxu0 0.0
      %741 = vmatpush1.msra.mxu0 0.0
      %742 = vmatprep.subr.mxu0 0.0
      %743 = vmatpush1.msra.mxu0 0.0
      %744 = vmatprep.subr.mxu0 0.0
      %745 = vmatpush1.msra.mxu0 0.0
      %746 = vmatprep.subr.mxu0 0.0
      %747 = vmatpush1.msra.mxu0 0.0
      %748 = vmatprep.subr.mxu0 0.0
      %749 = vmatpush1.msra.mxu0 0.0
      %750 = vmatprep.subr.mxu0 0.0
      %751 = vmatpush1.msra.mxu0 0.0
      %752 = vmatprep.subr.mxu0 0.0
      %753 = vmatpush1.msra.mxu0 0.0
      %754 = vmatprep.subr.mxu0 0.0
      %755 = vmatpush1.msra.mxu0 0.0
      %756 = vmatprep.subr.mxu0 0.0
      %757 = vmatpush1.msra.mxu0 0.0
      %758 = vmatprep.subr.mxu0 0.0
      %759 = vmatpush1.msra.mxu0 0.0
      %760 = vmatprep.subr.mxu0 0.0
      %761 = vmatpush1.msra.mxu0 0.0
      %762 = vmatprep.subr.mxu0 0.0
      %763 = vmatpush1.msra.mxu0 0.0
      %764 = vmatprep.subr.mxu0 0.0
      %765 = vmatpush1.msra.mxu0 0.0
      %766 = vmatprep.mubr.f32.mxu0 0.0
      %767 = vmatmul.mubr.f32.gmra.mrb[0].mxu0 %v700
      %v768 = vpop.f32.mrb[0].mxu0
      %v769 = vadd.f32 0.0, %v768
      %v770 = vpop.f32.mrb[0].mxu0
      %771 = vdwg.mxu0
      %v773 = vlaneseq
      %v774 = vshrl.u32 %v773, 7
      %v775 = vsub.s32 0, %v774
      %v776 = vrot.slane %v485, %v775
      %778 = vmatprep.subr.mxu0 0.0
      %779 = vmatpush1.msra.mxu0 %v769
      %780 = vmatprep.subr.mxu0 0.0
      %781 = vmatpush1.msra.mxu0 0.0
      %782 = vmatprep.subr.mxu0 0.0
      %783 = vmatpush1.msra.mxu0 0.0
      %784 = vmatprep.subr.mxu0 0.0
      %785 = vmatpush1.msra.mxu0 0.0
      %786 = vmatprep.subr.mxu0 0.0
      %787 = vmatpush1.msra.mxu0 0.0
      %788 = vmatprep.subr.mxu0 0.0
      %789 = vmatpush1.msra.mxu0 0.0
      %790 = vmatprep.subr.mxu0 0.0
      %791 = vmatpush1.msra.mxu0 0.0
      %792 = vmatprep.subr.mxu0 0.0
      %793 = vmatpush1.msra.mxu0 0.0
      %794 = vmatprep.subr.mxu0 0.0
      %795 = vmatpush1.msra.mxu0 0.0
      %796 = vmatprep.subr.mxu0 0.0
      %797 = vmatpush1.msra.mxu0 0.0
      %798 = vmatprep.subr.mxu0 0.0
      %799 = vmatpush1.msra.mxu0 0.0
      %800 = vmatprep.subr.mxu0 0.0
      %801 = vmatpush1.msra.mxu0 0.0
      %802 = vmatprep.subr.mxu0 0.0
      %803 = vmatpush1.msra.mxu0 0.0
      %804 = vmatprep.subr.mxu0 0.0
      %805 = vmatpush1.msra.mxu0 0.0
      %806 = vmatprep.subr.mxu0 0.0
      %807 = vmatpush1.msra.mxu0 0.0
      %808 = vmatprep.subr.mxu0 0.0
      %809 = vmatpush1.msra.mxu0 0.0
      %810 = vmatprep.subr.mxu0 0.0
      %811 = vmatpush1.msra.mxu0 0.0
      %812 = vmatprep.subr.mxu0 0.0
      %813 = vmatpush1.msra.mxu0 0.0
      %814 = vmatprep.subr.mxu0 0.0
      %815 = vmatpush1.msra.mxu0 0.0
      %816 = vmatprep.subr.mxu0 0.0
      %817 = vmatpush1.msra.mxu0 0.0
      %818 = vmatprep.subr.mxu0 0.0
      %819 = vmatpush1.msra.mxu0 0.0
      %820 = vmatprep.subr.mxu0 0.0
      %821 = vmatpush1.msra.mxu0 0.0
      %822 = vmatprep.subr.mxu0 0.0
      %823 = vmatpush1.msra.mxu0 0.0
      %824 = vmatprep.subr.mxu0 0.0
      %825 = vmatpush1.msra.mxu0 0.0
      %826 = vmatprep.subr.mxu0 0.0
      %827 = vmatpush1.msra.mxu0 0.0
      %828 = vmatprep.subr.mxu0 0.0
      %829 = vmatpush1.msra.mxu0 0.0
      %830 = vmatprep.subr.mxu0 0.0
      %831 = vmatpush1.msra.mxu0 0.0
      %832 = vmatprep.subr.mxu0 0.0
      %833 = vmatpush1.msra.mxu0 0.0
      %834 = vmatprep.subr.mxu0 0.0
      %835 = vmatpush1.msra.mxu0 0.0
      %836 = vmatprep.subr.mxu0 0.0
      %837 = vmatpush1.msra.mxu0 0.0
      %838 = vmatprep.subr.mxu0 0.0
      %839 = vmatpush1.msra.mxu0 0.0
      %840 = vmatprep.subr.mxu0 0.0
      %841 = vmatpush1.msra.mxu0 0.0
      %842 = vmatprep.mubr.f32.mxu0 0.0
      %843 = vmatmul.mubr.f32.gmra.mrb[0].mxu0 %v625
      %v844 = vpop.f32.mrb[0].mxu0
      %v845 = vadd.f32 %v776, %v844
      %v846 = vpop.f32.mrb[0].mxu0
      %847 = vdwg.mxu0
      %848 = vst.msk [vmem:[%s439] sm:$0xff] %vm458, %v845
      %p849 = scmp.lt.s32.totalorder %s23, 1
      %s850 = scalar_select %p849, %s23, 1
      %s851 = smul.addr %s850, 8
      %s852 = scalar_lea.vmem %s10, %s851
      %p853 = scmp.lt.s32.totalorder %s23, 1
      %s854 = scalar_select %p853, %s23, 1
      %s855 = smul.addr %s854, 8
      %s856 = scalar_lea.vmem %s11, %s855
      // Predicated region
      $region61: #{bargrain_forward.3} parent=59 // pred_check
        %p857 = pneg %p271
      $region62: #{bargrain_forward.3} parent=59 // pred_check_branch
        %859 = sbr.rel (%p857) target = $region64
      $region63: #{bargrain_forward.3} parent=59 // pred_region
        _
      $region64: #{bargrain_forward.3} parent=59 // pred_fallthru
        _
      // Predicated region
      $region65: #{bargrain_forward.3} parent=59 // pred_check
        %p860 = pneg %p297
      $region66: #{bargrain_forward.3} parent=59 // pred_check_branch
        %862 = sbr.rel (%p860) target = $region68
      $region67: #{bargrain_forward.3} parent=59 // pred_region
        _
      $region68: #{bargrain_forward.3} parent=59 // pred_fallthru
        _
    $region60: #{bargrain_forward.3} parent=5 // pred_fallthru
      _
    %p863 = scmp.le.s32.totalorder 2, %s18
    // Predicated region
    $region69: #{bargrain_forward.3} parent=5 // pred_check
      %p864 = pneg %p863
    $region70: #{bargrain_forward.3} parent=5 // pred_check_branch
      %866 = sbr.rel (%p864) target = $region72
    $region71: #{bargrain_forward.3} parent=5 // pred_region
      %s867 = ssub.s32 %s18, 2
      // Predicated region
      $region73: #{bargrain_forward.3} parent=71 // pred_check
        %p868 = pneg %p277
      $region74: #{bargrain_forward.3} parent=71 // pred_check_branch
        %870 = sbr.rel (%p868) target = $region76
      $region75: #{bargrain_forward.3} parent=71 // pred_region
        %p871 = scmp.lt.s32.totalorder %s24, 1
        %s872 = scalar_select %p871, %s24, 1
        %s873 = smul.addr %s872, 8
        %s874 = scalar_lea.vmem %s10, %s873
      $region76: #{bargrain_forward.3} parent=71 // pred_fallthru
        _
      // Predicated region
      $region77: #{bargrain_forward.3} parent=71 // pred_check
        %p875 = pneg %p303
      $region78: #{bargrain_forward.3} parent=71 // pred_check_branch
        %877 = sbr.rel (%p875) target = $region80
      $region79: #{bargrain_forward.3} parent=71 // pred_region
        %p878 = scmp.lt.s32.totalorder %s24, 1
        %s879 = scalar_select %p878, %s24, 1
        %s880 = smul.addr %s879, 8
        %s881 = scalar_lea.vmem %s11, %s880
      $region80: #{bargrain_forward.3} parent=71 // pred_fallthru
        _
    $region72: #{bargrain_forward.3} parent=5 // pred_fallthru
      _
  $region6: #{bargrain_forward.3} parent=0 // loop_footer
    %s22 = sadd.s32 1, %s18
  $region7: #{bargrain_forward.3} parent=0 // loop_footer_branch
    %17 = sbr.rel target = $region3
  $region8: #{bargrain_forward.3} parent=0 // loop_exit
    _

</llo_original>
